<compile_context>
chip_gen: v7x
topology: tpu7x:2x2x1
jax: 0.10.0
libtpu: 0.0.40
codegen_flags: <defaults>
</compile_context>

<pallas_src>
import numpy as np
import jax
import jax.numpy as jnp
from jax.experimental import pallas as pl
from jax.experimental.pallas import tpu as pltpu

_EPS = 1e-8


# ----------------------------------------------------------------------------
# Deterministic parameter setup (module __init__ equivalent, plain numpy glue).
# ----------------------------------------------------------------------------
def _rot_xyz(ax, ay, az):
    cx, sx = np.cos(ax), np.sin(ax)
    cy, sy = np.cos(ay), np.sin(ay)
    cz, sz = np.cos(az), np.sin(az)
    Rx = np.array([[1, 0, 0], [0, cx, -sx], [0, sx, cx]], np.float64)
    Ry = np.array([[cy, 0, sy], [0, 1, 0], [-sy, 0, cy]], np.float64)
    Rz = np.array([[cz, -sz, 0], [sz, cz, 0], [0, 0, 1]], np.float64)
    return (Rz @ Ry @ Rx).astype(np.float32)


# camera 1 intrinsics (axes = identity, aperture at the origin, +x optical axis)
PRINCIPAL = (8.0, 8.0)
FOCAL = 20.0
INV_F = 1.0 / FOCAL
CX, CY = PRINCIPAL

# radial distortion coefficients are nn.Parameters initialized to zero in the
# module -> undistort/distort are exact identities and distortion_penalty == 0.
RADIAL_COEFFS = np.zeros(3, np.float32)

# prism parameters (nn.Parameter equivalents, deterministic values)
PRISM_CENTER = np.array([50.0, 0.0, 0.0], np.float32)
PRISM_ANGLES = np.array([0.02, 0.03, 0.01], np.float32)
PRISM_SIZE = 20.0
N_GLASS = 1.51                                  # module default refractive index

R_PRISM = _rot_xyz(*PRISM_ANGLES.tolist())
PRISM_N = (R_PRISM @ np.array([1.0, 0.0, 0.0], np.float32)).astype(np.float64)
_HALF = PRISM_SIZE / 2.0
P_ENTRY = PRISM_CENTER.astype(np.float64) - _HALF * PRISM_N
P_EXIT = PRISM_CENTER.astype(np.float64) + _HALF * PRISM_N

NX, NY, NZ = float(PRISM_N[0]), float(PRISM_N[1]), float(PRISM_N[2])
C_ENTRY = float(np.dot(P_ENTRY, PRISM_N))         # plane offset of the entry face
THICK = float(np.dot(P_EXIT - P_ENTRY, PRISM_N))  # slab thickness along normal
ETA_IN = 1.0 / N_GLASS
ETA_OUT = N_GLASS

# packed output slab row layout: row = 2 * quantity + half  (quantity-major,
# half-minor) so slab.reshape(8, 2*N) directly gives the hstack-ed layout.
ROWS_PER_HALF = 8   # px, py, pz, dist, reproj_u, reproj_v, loss, ipen
N_SLAB_ROWS = 2 * ROWS_PER_HALF


# ----------------------------------------------------------------------------
# In-kernel helpers; every argument/return is a dense (width, 128) f32 array.
# ----------------------------------------------------------------------------
def _recip(x):
    """EUP approx reciprocal + one Newton-Raphson step (~f32 accurate).

    The NR step is 2 VALU ops; the kernel is EUP-latency bound, so it is
    essentially free and removes the ~12-bit approx error that would otherwise
    be amplified in the triangulation / reprojection divides.
    """
    r = pl.reciprocal(x, approx=True)
    return r * (2.0 - x * r)


def _cam_dir(u, v):
    """Pinhole back-projection, camera axes == identity (mul-by-0/1 removed)."""
    a = (u - CX) * INV_F
    b = (v - CY) * INV_F
    inv = jax.lax.rsqrt(1.0 + a * a + b * b)
    return inv, a * inv, b * inv                  # unit direction (dx, dy, dz)


def _refract(dx, dy, dz, cos_i, eta):
    """Snell refraction; face normal points along the ray's travel direction.

    TODO(synk): total internal reflection is clamped to a grazing transmitted
    ray (cos_t = 0); with this geometry (<= ~20 deg inside glass) TIR never
    triggers, but a physically-exact reference would reflect instead.
    """
    sin2_t = (eta * eta) * (1.0 - cos_i * cos_i)
    cos_t = jnp.sqrt(jnp.maximum(1.0 - sin2_t, 0.0))
    k = cos_t - eta * cos_i
    tx = eta * dx + k * NX
    ty = eta * dy + k * NY
    tz = eta * dz + k * NZ
    inv = jax.lax.rsqrt(tx * tx + ty * ty + tz * tz)
    return tx * inv, ty * inv, tz * inv


def _prism_trace(dx, dy, dz):
    """Trace a camera ray (origin at the world origin) through the glass prism.

    Returns the emergent ray (origin, direction) and the intersection penalty
    (sum of max(-t, 0) over the two face hits).
    """
    # air -> glass (entry face).  Ray origin is 0, so hit1 . n == C_ENTRY.
    cosd = jnp.maximum(dx * NX + dy * NY + dz * NZ, _EPS)
    t1 = C_ENTRY * _recip(cosd)
    h1x, h1y, h1z = t1 * dx, t1 * dy, t1 * dz
    gx, gy, gz = _refract(dx, dy, dz, cosd, ETA_IN)

    # glass -> air (exit face); distance along normal between faces is THICK.
    cosg = jnp.maximum(gx * NX + gy * NY + gz * NZ, _EPS)
    t2 = THICK * _recip(cosg)
    h2x, h2y, h2z = h1x + t2 * gx, h1y + t2 * gy, h1z + t2 * gz
    ex, ey, ez = _refract(gx, gy, gz, cosg, ETA_OUT)

    ipen = jnp.maximum(-t1, 0.0) + jnp.maximum(-t2, 0.0)
    return (h2x, h2y, h2z), (ex, ey, ez), ipen


def _closest_point_unit(d1x, d1y, d1z, o2x, o2y, o2z, d2x, d2y, d2z):
    """Skew-line triangulation; ray-1 origin is 0 and both dirs are unit (a=c=1)."""
    b = d1x * d2x + d1y * d2y + d1z * d2z
    d = -(d1x * o2x + d1y * o2y + d1z * o2z)      # d1 . (o1 - o2)
    e = -(d2x * o2x + d2y * o2y + d2z * o2z)      # d2 . (o1 - o2)
    inv = _recip(jnp.maximum(1.0 - b * b, _EPS))
    s = (b * e - d) * inv
    t = (e - b * d) * inv
    q1x, q1y, q1z = s * d1x, s * d1y, s * d1z
    q2x, q2y, q2z = o2x + t * d2x, o2y + t * d2y, o2z + t * d2z
    rx, ry, rz = 0.5 * (q1x + q2x), 0.5 * (q1y + q2y), 0.5 * (q1z + q2z)
    dist = jnp.sqrt((q1x - q2x) ** 2 + (q1y - q2y) ** 2 + (q1z - q2z) ** 2)
    return rx, ry, rz, dist


def _slice_body(pixr_ref, pixv_ref, out_ref, pair_ref, off, width):
    """Full pipeline for one `width`-sublane slice (width is a Python int 8/16)."""
    sub = pl.ds(off, width)

    recons = []
    for half in range(2):                  # hstack halves: input rows (0,1) / (2,3)
        c = 2 * half
        ru = pixr_ref[c, sub, :]           # real pixel u   (width, 128)
        rv = pixr_ref[c + 1, sub, :]       # real pixel v
        vu = pixv_ref[c, sub, :]           # virtual pixel u
        vv = pixv_ref[c + 1, sub, :]       # virtual pixel v

        # undistort_pixels_classical: radial coeffs baked to zero -> identity.

        # camera back-projection (real ray triangulates, virtual ray goes
        # through the prism).
        d1x, d1y, d1z = _cam_dir(ru, rv)
        cdx, cdy, cdz = _cam_dir(vu, vv)

        (o2x, o2y, o2z), (d2x, d2y, d2z), ipen = _prism_trace(cdx, cdy, cdz)

        px, py, pz, dist = _closest_point_unit(
            d1x, d1y, d1z, o2x, o2y, o2z, d2x, d2y, d2z)

        # reproject with R1 = I, T1 = 0 (identity axes, aperture at origin)
        px_safe = jnp.where(jnp.abs(px) < _EPS, _EPS, px)
        inv_x = _recip(px_safe)
        uu = CX + FOCAL * py * inv_x
        vvp = CY + FOCAL * pz * inv_x
        # distort_pixels_classical == identity (zero coeffs)
        loss = 0.5 * jnp.sqrt((uu - ru) ** 2 + (vvp - rv) ** 2)

        # quantity-major / half-minor rows: row = 2 * quantity + half
        out_ref[0 * 2 + half, sub, :] = px
        out_ref[1 * 2 + half, sub, :] = py
        out_ref[2 * 2 + half, sub, :] = pz
        out_ref[3 * 2 + half, sub, :] = dist
        out_ref[4 * 2 + half, sub, :] = uu
        out_ref[5 * 2 + half, sub, :] = vvp
        out_ref[6 * 2 + half, sub, :] = loss
        out_ref[7 * 2 + half, sub, :] = ipen
        recons.append((px, py, pz))

    (ax_, ay_, az_), (bx_, by_, bz_) = recons
    pair = jnp.sqrt((ax_ - bx_) ** 2 + (ay_ - by_) ** 2 + (az_ - bz_) ** 2)
    pair_ref[sub, :] = pair


def _make_kernel(sub):
    """Kernel factory: SUB-sublane block, inner 16-sublane slices (+8 tail)."""
    n16 = sub // 16
    tail = sub - 16 * n16                        # 0 or 8

    def kernel(pixr_ref, pixv_ref, out_ref, pair_ref):
        # pixr/pixv: (4, SUB, 128); out: (16, SUB, 128); pair: (SUB, 128)
        if n16 > 0:
            @pl.loop(0, n16)
            def _(s):
                off = pl.multiple_of(s * 16, 16)
                # 16-sublane slice = 2 vregs per intermediate -> two independent
                # EUP chains per op, hiding rsqrt/reciprocal/sqrt latency.
                _slice_body(pixr_ref, pixv_ref, out_ref, pair_ref, off, 16)
        if tail:
            _slice_body(pixr_ref, pixv_ref, out_ref, pair_ref, 16 * n16, tail)

    return kernel


# ----------------------------------------------------------------------------
# Wrapper: layout plumbing + pallas_call + (reshape-only) unpacking.
# ----------------------------------------------------------------------------
def _pick_sub_tile(n_sub):
    """Largest sublane tile (<= 512) dividing n_sub.

    Prefers tiles that (a) keep >= 2 grid steps (v7x has 2 TensorCores) and
    (b) are a multiple of 16 (so the whole block runs through the 16-wide
    slice path); relaxes those constraints for small inputs.
    """
    for require_two_steps in (True, False):
        for mult in (16, 8):
            for cand in range(512, 0, -8):
                if cand % mult:
                    continue
                if n_sub % cand:
                    continue
                if require_two_steps and n_sub // cand < 2:
                    continue
                return cand
    raise ValueError("number of points must be a multiple of 1024 (8x128 tile)")


def arena_forward(pixels_real_two_cams, pixels_virtual_two_cams):
    four, n = pixels_real_two_cams.shape
    assert four == 4 and pixels_virtual_two_cams.shape == (4, n)
    assert n % 1024 == 0, "point count must be a multiple of 1024 (8x128 tile)"

    n_sub = n // 128
    sub = _pick_sub_tile(n_sub)
    grid = n_sub // sub

    # pack the point index into (sublane, lane): point j -> (j // 128, j % 128)
    pr3 = pixels_real_two_cams.astype(jnp.float32).reshape(4, n_sub, 128)
    pv3 = pixels_virtual_two_cams.astype(jnp.float32).reshape(4, n_sub, 128)

    in_spec = pl.BlockSpec((4, sub, 128), lambda i: (0, i, 0))
    slab_spec = pl.BlockSpec((N_SLAB_ROWS, sub, 128), lambda i: (0, i, 0))
    pair_spec = pl.BlockSpec((sub, 128), lambda i: (i, 0))

    # advisory cost estimate so XLA schedules neighbouring ops correctly
    cost = pl.CostEstimate(flops=330 * n, transcendentals=25 * n,
                           bytes_accessed=100 * n)

    slab, pair = pl.pallas_call(
        _make_kernel(sub),
        out_shape=(
            jax.ShapeDtypeStruct((N_SLAB_ROWS, n_sub, 128), jnp.float32),
            jax.ShapeDtypeStruct((n_sub, 128), jnp.float32),
        ),
        grid_spec=pltpu.PrefetchScalarGridSpec(
            num_scalar_prefetch=0,
            grid=(grid,),
            in_specs=[in_spec, in_spec],
            out_specs=(slab_spec, pair_spec),
        ),
        compiler_params=pltpu.CompilerParams(
            dimension_semantics=("parallel",),
            # SUB=512 double-buffered is ~13 MiB; raise v5e's 16 MiB scoped
            # default explicitly (still well under every chip's physical VMEM).
            vmem_limit_bytes=32 * 1024 * 1024,
        ),
        cost_estimate=cost,
    )(pr3, pv3)

    # Quantity-major / half-minor slab: reshape is free, no concatenates.
    slab2 = slab.reshape(ROWS_PER_HALF, 2 * n)      # (8, 2n)

    recon_3D = slab2[0:3]                           # (3, 2n)
    closest_distance = slab2[3]                     # (2n,)
    recon_distorted_real = slab2[4:6]               # (2, 2n)
    recon_loss_real = slab2[6]                      # (2n,)
    intersection_penalty = slab2[7]                 # (2n,)
    pairwise_distance = pair.reshape(n)             # (n,)
    # radial distortion coefficients are baked to zero -> distort == identity ->
    # the module's distortion penalty is exactly zero (constant output).
    distortion_penalty = jnp.zeros((2 * n,), jnp.float32)

    return (recon_3D, closest_distance, recon_distorted_real, recon_loss_real,
            pairwise_distance, intersection_penalty, distortion_penalty)


if __name__ == "__main__":
    key = jax.random.PRNGKey(0)
    k1, k2 = jax.random.split(key)
    N = 8192
    pixels_real = jax.random.uniform(k1, (4, N), jnp.float32, 0.0, 16.0)
    pixels_virtual = jax.random.uniform(k2, (4, N), jnp.float32, 0.0, 16.0)

    outs = arena_forward(pixels_real, pixels_virtual)
    outs = jax.block_until_ready(outs)

    assert outs[0].shape == (3, 2 * N)
    assert outs[1].shape == (2 * N,)
    assert outs[2].shape == (2, 2 * N)
    assert outs[3].shape == (2 * N,)
    assert outs[4].shape == (N,)
    assert outs[5].shape == (2 * N,)
    assert outs[6].shape == (2 * N,)
    assert all(bool(jnp.isfinite(o).all()) for o in outs)
    print("KERNEL_OK")
</pallas_src>

<mosaic_0001>
module attributes {stable_mosaic.version = 11 : i64} {
  func.func @kernel(%arg0: i32, %arg1: memref<4x32x128xf32, #tpu.memory_space<vmem>>, %arg2: memref<4x32x128xf32, #tpu.memory_space<vmem>>, %arg3: memref<16x32x128xf32, #tpu.memory_space<vmem>>, %arg4: memref<32x128xf32, #tpu.memory_space<vmem>>) attributes {dimension_semantics = [#tpu.dimension_semantics<parallel>], iteration_bounds = array<i64: 2>, scalar_prefetch = 0 : i64, scratch_operands = 0 : i64, tpu.core_type = #tpu.core_type<tc>, window_params = [{transform_indices = @transform_0, window_bounds = array<i64: 4, 32, 128>}, {transform_indices = @transform_1, window_bounds = array<i64: 4, 32, 128>}, {transform_indices = @transform_2, window_bounds = array<i64: 16, 32, 128>}, {transform_indices = @transform_3, window_bounds = array<i64: 32, 128>}]} {
    %c0_i32 = arith.constant 0 : i32
    %c2_i32 = arith.constant 2 : i32
    %0 = arith.addi %c0_i32, %c2_i32 : i32
    %c1_i32 = arith.constant 1 : i32
    scf.for %arg5 = %c0_i32 to %0 step %c1_i32  : i32 {
      %c1_i32_1 = arith.constant 1 : i32
      %1 = arith.muli %arg5, %c1_i32_1 : i32
      %c0_i32_2 = arith.constant 0 : i32
      %2 = arith.addi %c0_i32_2, %1 : i32
      %c16_i32 = arith.constant 16 : i32
      %3 = arith.muli %2, %c16_i32 : i32
      %4 = tpu.assume_multiple %3, 16 : i32
      %c0 = arith.constant 0 : index
      %5 = arith.index_cast %4 : i32 to index
      %c0_3 = arith.constant 0 : index
      %6 = vector.load %arg1[%c0, %5, %c0_3] : memref<4x32x128xf32, #tpu.memory_space<vmem>>, vector<1x16x128xf32>
      %7 = vector.shape_cast %6 : vector<1x16x128xf32> to vector<16x128xf32>
      %c1 = arith.constant 1 : index
      %8 = arith.index_cast %4 : i32 to index
      %c0_4 = arith.constant 0 : index
      %9 = vector.load %arg1[%c1, %8, %c0_4] : memref<4x32x128xf32, #tpu.memory_space<vmem>>, vector<1x16x128xf32>
      %10 = vector.shape_cast %9 : vector<1x16x128xf32> to vector<16x128xf32>
      %c0_5 = arith.constant 0 : index
      %11 = arith.index_cast %4 : i32 to index
      %c0_6 = arith.constant 0 : index
      %12 = vector.load %arg2[%c0_5, %11, %c0_6] : memref<4x32x128xf32, #tpu.memory_space<vmem>>, vector<1x16x128xf32>
      %13 = vector.shape_cast %12 : vector<1x16x128xf32> to vector<16x128xf32>
      %c1_7 = arith.constant 1 : index
      %14 = arith.index_cast %4 : i32 to index
      %c0_8 = arith.constant 0 : index
      %15 = vector.load %arg2[%c1_7, %14, %c0_8] : memref<4x32x128xf32, #tpu.memory_space<vmem>>, vector<1x16x128xf32>
      %16 = vector.shape_cast %15 : vector<1x16x128xf32> to vector<16x128xf32>
      %cst = arith.constant 8.000000e+00 : f32
      %17 = vector.broadcast %cst : f32 to vector<16x128xf32>
      %18 = arith.subf %7, %17 : vector<16x128xf32>
      %cst_9 = arith.constant 5.000000e-02 : f32
      %19 = vector.broadcast %cst_9 : f32 to vector<16x128xf32>
      %20 = arith.mulf %18, %19 : vector<16x128xf32>
      %cst_10 = arith.constant 8.000000e+00 : f32
      %21 = vector.broadcast %cst_10 : f32 to vector<16x128xf32>
      %22 = arith.subf %10, %21 : vector<16x128xf32>
      %cst_11 = arith.constant 5.000000e-02 : f32
      %23 = vector.broadcast %cst_11 : f32 to vector<16x128xf32>
      %24 = arith.mulf %22, %23 : vector<16x128xf32>
      %25 = arith.mulf %20, %20 : vector<16x128xf32>
      %cst_12 = arith.constant 1.000000e+00 : f32
      %26 = vector.broadcast %cst_12 : f32 to vector<16x128xf32>
      %27 = arith.addf %26, %25 : vector<16x128xf32>
      %28 = arith.mulf %24, %24 : vector<16x128xf32>
      %29 = arith.addf %27, %28 : vector<16x128xf32>
      %30 = math.rsqrt %29 : vector<16x128xf32>
      %31 = arith.mulf %20, %30 : vector<16x128xf32>
      %32 = arith.mulf %24, %30 : vector<16x128xf32>
      %cst_13 = arith.constant 8.000000e+00 : f32
      %33 = vector.broadcast %cst_13 : f32 to vector<16x128xf32>
      %34 = arith.subf %13, %33 : vector<16x128xf32>
      %cst_14 = arith.constant 5.000000e-02 : f32
      %35 = vector.broadcast %cst_14 : f32 to vector<16x128xf32>
      %36 = arith.mulf %34, %35 : vector<16x128xf32>
      %cst_15 = arith.constant 8.000000e+00 : f32
      %37 = vector.broadcast %cst_15 : f32 to vector<16x128xf32>
      %38 = arith.subf %16, %37 : vector<16x128xf32>
      %cst_16 = arith.constant 5.000000e-02 : f32
      %39 = vector.broadcast %cst_16 : f32 to vector<16x128xf32>
      %40 = arith.mulf %38, %39 : vector<16x128xf32>
      %41 = arith.mulf %36, %36 : vector<16x128xf32>
      %cst_17 = arith.constant 1.000000e+00 : f32
      %42 = vector.broadcast %cst_17 : f32 to vector<16x128xf32>
      %43 = arith.addf %42, %41 : vector<16x128xf32>
      %44 = arith.mulf %40, %40 : vector<16x128xf32>
      %45 = arith.addf %43, %44 : vector<16x128xf32>
      %46 = math.rsqrt %45 : vector<16x128xf32>
      %47 = arith.mulf %36, %46 : vector<16x128xf32>
      %48 = arith.mulf %40, %46 : vector<16x128xf32>
      %cst_18 = arith.constant 0.999500036 : f32
      %49 = vector.broadcast %cst_18 : f32 to vector<16x128xf32>
      %50 = arith.mulf %46, %49 : vector<16x128xf32>
      %cst_19 = arith.constant 0.00999533385 : f32
      %51 = vector.broadcast %cst_19 : f32 to vector<16x128xf32>
      %52 = arith.mulf %47, %51 : vector<16x128xf32>
      %53 = arith.addf %50, %52 : vector<16x128xf32>
      %cst_20 = arith.constant -2.999550e-02 : f32
      %54 = vector.broadcast %cst_20 : f32 to vector<16x128xf32>
      %55 = arith.mulf %48, %54 : vector<16x128xf32>
      %56 = arith.addf %53, %55 : vector<16x128xf32>
      %cst_21 = arith.constant 9.99999993E-9 : f32
      %57 = vector.broadcast %cst_21 : f32 to vector<16x128xf32>
      %58 = arith.maximumf %56, %57 : vector<16x128xf32>
      %59 = tpu.reciprocal %58 {approx = true} : vector<16x128xf32> -> vector<16x128xf32>
      %60 = arith.mulf %58, %59 : vector<16x128xf32>
      %cst_22 = arith.constant 2.000000e+00 : f32
      %61 = vector.broadcast %cst_22 : f32 to vector<16x128xf32>
      %62 = arith.subf %61, %60 : vector<16x128xf32>
      %63 = arith.mulf %59, %62 : vector<16x128xf32>
      %cst_23 = arith.constant 39.9750023 : f32
      %64 = vector.broadcast %cst_23 : f32 to vector<16x128xf32>
      %65 = arith.mulf %64, %63 : vector<16x128xf32>
      %66 = arith.mulf %65, %46 : vector<16x128xf32>
      %67 = arith.mulf %65, %47 : vector<16x128xf32>
      %68 = arith.mulf %65, %48 : vector<16x128xf32>
      %69 = arith.mulf %58, %58 : vector<16x128xf32>
      %cst_24 = arith.constant 1.000000e+00 : f32
      %70 = vector.broadcast %cst_24 : f32 to vector<16x128xf32>
      %71 = arith.subf %70, %69 : vector<16x128xf32>
      %cst_25 = arith.constant 0.438577265 : f32
      %72 = vector.broadcast %cst_25 : f32 to vector<16x128xf32>
      %73 = arith.mulf %72, %71 : vector<16x128xf32>
      %cst_26 = arith.constant 1.000000e+00 : f32
      %74 = vector.broadcast %cst_26 : f32 to vector<16x128xf32>
      %75 = arith.subf %74, %73 : vector<16x128xf32>
      %cst_27 = arith.constant 0.000000e+00 : f32
      %76 = vector.broadcast %cst_27 : f32 to vector<16x128xf32>
      %77 = arith.maximumf %75, %76 : vector<16x128xf32>
      %78 = math.sqrt %77 : vector<16x128xf32>
      %cst_28 = arith.constant 0.662251651 : f32
      %79 = vector.broadcast %cst_28 : f32 to vector<16x128xf32>
      %80 = arith.mulf %79, %58 : vector<16x128xf32>
      %81 = arith.subf %78, %80 : vector<16x128xf32>
      %cst_29 = arith.constant 0.662251651 : f32
      %82 = vector.broadcast %cst_29 : f32 to vector<16x128xf32>
      %83 = arith.mulf %82, %46 : vector<16x128xf32>
      %cst_30 = arith.constant 0.999500036 : f32
      %84 = vector.broadcast %cst_30 : f32 to vector<16x128xf32>
      %85 = arith.mulf %81, %84 : vector<16x128xf32>
      %86 = arith.addf %83, %85 : vector<16x128xf32>
      %cst_31 = arith.constant 0.662251651 : f32
      %87 = vector.broadcast %cst_31 : f32 to vector<16x128xf32>
      %88 = arith.mulf %87, %47 : vector<16x128xf32>
      %cst_32 = arith.constant 0.00999533385 : f32
      %89 = vector.broadcast %cst_32 : f32 to vector<16x128xf32>
      %90 = arith.mulf %81, %89 : vector<16x128xf32>
      %91 = arith.addf %88, %90 : vector<16x128xf32>
      %cst_33 = arith.constant 0.662251651 : f32
      %92 = vector.broadcast %cst_33 : f32 to vector<16x128xf32>
      %93 = arith.mulf %92, %48 : vector<16x128xf32>
      %cst_34 = arith.constant -2.999550e-02 : f32
      %94 = vector.broadcast %cst_34 : f32 to vector<16x128xf32>
      %95 = arith.mulf %81, %94 : vector<16x128xf32>
      %96 = arith.addf %93, %95 : vector<16x128xf32>
      %97 = arith.mulf %86, %86 : vector<16x128xf32>
      %98 = arith.mulf %91, %91 : vector<16x128xf32>
      %99 = arith.addf %97, %98 : vector<16x128xf32>
      %100 = arith.mulf %96, %96 : vector<16x128xf32>
      %101 = arith.addf %99, %100 : vector<16x128xf32>
      %102 = math.rsqrt %101 : vector<16x128xf32>
      %103 = arith.mulf %86, %102 : vector<16x128xf32>
      %104 = arith.mulf %91, %102 : vector<16x128xf32>
      %105 = arith.mulf %96, %102 : vector<16x128xf32>
      %cst_35 = arith.constant 0.999500036 : f32
      %106 = vector.broadcast %cst_35 : f32 to vector<16x128xf32>
      %107 = arith.mulf %103, %106 : vector<16x128xf32>
      %cst_36 = arith.constant 0.00999533385 : f32
      %108 = vector.broadcast %cst_36 : f32 to vector<16x128xf32>
      %109 = arith.mulf %104, %108 : vector<16x128xf32>
      %110 = arith.addf %107, %109 : vector<16x128xf32>
      %cst_37 = arith.constant -2.999550e-02 : f32
      %111 = vector.broadcast %cst_37 : f32 to vector<16x128xf32>
      %112 = arith.mulf %105, %111 : vector<16x128xf32>
      %113 = arith.addf %110, %112 : vector<16x128xf32>
      %cst_38 = arith.constant 9.99999993E-9 : f32
      %114 = vector.broadcast %cst_38 : f32 to vector<16x128xf32>
      %115 = arith.maximumf %113, %114 : vector<16x128xf32>
      %116 = tpu.reciprocal %115 {approx = true} : vector<16x128xf32> -> vector<16x128xf32>
      %117 = arith.mulf %115, %116 : vector<16x128xf32>
      %cst_39 = arith.constant 2.000000e+00 : f32
      %118 = vector.broadcast %cst_39 : f32 to vector<16x128xf32>
      %119 = arith.subf %118, %117 : vector<16x128xf32>
      %120 = arith.mulf %116, %119 : vector<16x128xf32>
      %cst_40 = arith.constant 2.000000e+01 : f32
      %121 = vector.broadcast %cst_40 : f32 to vector<16x128xf32>
      %122 = arith.mulf %121, %120 : vector<16x128xf32>
      %123 = arith.mulf %122, %103 : vector<16x128xf32>
      %124 = arith.addf %66, %123 : vector<16x128xf32>
      %125 = arith.mulf %122, %104 : vector<16x128xf32>
      %126 = arith.addf %67, %125 : vector<16x128xf32>
      %127 = arith.mulf %122, %105 : vector<16x128xf32>
      %128 = arith.addf %68, %127 : vector<16x128xf32>
      %129 = arith.mulf %115, %115 : vector<16x128xf32>
      %cst_41 = arith.constant 1.000000e+00 : f32
      %130 = vector.broadcast %cst_41 : f32 to vector<16x128xf32>
      %131 = arith.subf %130, %129 : vector<16x128xf32>
      %cst_42 = arith.constant 2.280100e+00 : f32
      %132 = vector.broadcast %cst_42 : f32 to vector<16x128xf32>
      %133 = arith.mulf %132, %131 : vector<16x128xf32>
      %cst_43 = arith.constant 1.000000e+00 : f32
      %134 = vector.broadcast %cst_43 : f32 to vector<16x128xf32>
      %135 = arith.subf %134, %133 : vector<16x128xf32>
      %cst_44 = arith.constant 0.000000e+00 : f32
      %136 = vector.broadcast %cst_44 : f32 to vector<16x128xf32>
      %137 = arith.maximumf %135, %136 : vector<16x128xf32>
      %138 = math.sqrt %137 : vector<16x128xf32>
      %cst_45 = arith.constant 1.510000e+00 : f32
      %139 = vector.broadcast %cst_45 : f32 to vector<16x128xf32>
      %140 = arith.mulf %139, %115 : vector<16x128xf32>
      %141 = arith.subf %138, %140 : vector<16x128xf32>
      %cst_46 = arith.constant 1.510000e+00 : f32
      %142 = vector.broadcast %cst_46 : f32 to vector<16x128xf32>
      %143 = arith.mulf %142, %103 : vector<16x128xf32>
      %cst_47 = arith.constant 0.999500036 : f32
      %144 = vector.broadcast %cst_47 : f32 to vector<16x128xf32>
      %145 = arith.mulf %141, %144 : vector<16x128xf32>
      %146 = arith.addf %143, %145 : vector<16x128xf32>
      %cst_48 = arith.constant 1.510000e+00 : f32
      %147 = vector.broadcast %cst_48 : f32 to vector<16x128xf32>
      %148 = arith.mulf %147, %104 : vector<16x128xf32>
      %cst_49 = arith.constant 0.00999533385 : f32
      %149 = vector.broadcast %cst_49 : f32 to vector<16x128xf32>
      %150 = arith.mulf %141, %149 : vector<16x128xf32>
      %151 = arith.addf %148, %150 : vector<16x128xf32>
      %cst_50 = arith.constant 1.510000e+00 : f32
      %152 = vector.broadcast %cst_50 : f32 to vector<16x128xf32>
      %153 = arith.mulf %152, %105 : vector<16x128xf32>
      %cst_51 = arith.constant -2.999550e-02 : f32
      %154 = vector.broadcast %cst_51 : f32 to vector<16x128xf32>
      %155 = arith.mulf %141, %154 : vector<16x128xf32>
      %156 = arith.addf %153, %155 : vector<16x128xf32>
      %157 = arith.mulf %146, %146 : vector<16x128xf32>
      %158 = arith.mulf %151, %151 : vector<16x128xf32>
      %159 = arith.addf %157, %158 : vector<16x128xf32>
      %160 = arith.mulf %156, %156 : vector<16x128xf32>
      %161 = arith.addf %159, %160 : vector<16x128xf32>
      %162 = math.rsqrt %161 : vector<16x128xf32>
      %163 = arith.mulf %146, %162 : vector<16x128xf32>
      %164 = arith.mulf %151, %162 : vector<16x128xf32>
      %165 = arith.mulf %156, %162 : vector<16x128xf32>
      %cst_52 = arith.constant 0.000000e+00 : f32
      %166 = vector.broadcast %cst_52 : f32 to vector<16x128xf32>
      %167 = arith.subf %166, %65 : vector<16x128xf32>
      %cst_53 = arith.constant 0.000000e+00 : f32
      %168 = vector.broadcast %cst_53 : f32 to vector<16x128xf32>
      %169 = arith.maximumf %167, %168 : vector<16x128xf32>
      %cst_54 = arith.constant 0.000000e+00 : f32
      %170 = vector.broadcast %cst_54 : f32 to vector<16x128xf32>
      %171 = arith.subf %170, %122 : vector<16x128xf32>
      %cst_55 = arith.constant 0.000000e+00 : f32
      %172 = vector.broadcast %cst_55 : f32 to vector<16x128xf32>
      %173 = arith.maximumf %171, %172 : vector<16x128xf32>
      %174 = arith.addf %169, %173 : vector<16x128xf32>
      %175 = arith.mulf %30, %163 : vector<16x128xf32>
      %176 = arith.mulf %31, %164 : vector<16x128xf32>
      %177 = arith.addf %175, %176 : vector<16x128xf32>
      %178 = arith.mulf %32, %165 : vector<16x128xf32>
      %179 = arith.addf %177, %178 : vector<16x128xf32>
      %180 = arith.mulf %30, %124 : vector<16x128xf32>
      %181 = arith.mulf %31, %126 : vector<16x128xf32>
      %182 = arith.addf %180, %181 : vector<16x128xf32>
      %183 = arith.mulf %32, %128 : vector<16x128xf32>
      %184 = arith.addf %182, %183 : vector<16x128xf32>
      %cst_56 = arith.constant 0.000000e+00 : f32
      %185 = vector.broadcast %cst_56 : f32 to vector<16x128xf32>
      %186 = arith.subf %185, %184 : vector<16x128xf32>
      %187 = arith.mulf %163, %124 : vector<16x128xf32>
      %188 = arith.mulf %164, %126 : vector<16x128xf32>
      %189 = arith.addf %187, %188 : vector<16x128xf32>
      %190 = arith.mulf %165, %128 : vector<16x128xf32>
      %191 = arith.addf %189, %190 : vector<16x128xf32>
      %cst_57 = arith.constant 0.000000e+00 : f32
      %192 = vector.broadcast %cst_57 : f32 to vector<16x128xf32>
      %193 = arith.subf %192, %191 : vector<16x128xf32>
      %194 = arith.mulf %179, %179 : vector<16x128xf32>
      %cst_58 = arith.constant 1.000000e+00 : f32
      %195 = vector.broadcast %cst_58 : f32 to vector<16x128xf32>
      %196 = arith.subf %195, %194 : vector<16x128xf32>
      %cst_59 = arith.constant 9.99999993E-9 : f32
      %197 = vector.broadcast %cst_59 : f32 to vector<16x128xf32>
      %198 = arith.maximumf %196, %197 : vector<16x128xf32>
      %199 = tpu.reciprocal %198 {approx = true} : vector<16x128xf32> -> vector<16x128xf32>
      %200 = arith.mulf %198, %199 : vector<16x128xf32>
      %cst_60 = arith.constant 2.000000e+00 : f32
      %201 = vector.broadcast %cst_60 : f32 to vector<16x128xf32>
      %202 = arith.subf %201, %200 : vector<16x128xf32>
      %203 = arith.mulf %199, %202 : vector<16x128xf32>
      %204 = arith.mulf %179, %193 : vector<16x128xf32>
      %205 = arith.subf %204, %186 : vector<16x128xf32>
      %206 = arith.mulf %205, %203 : vector<16x128xf32>
      %207 = arith.mulf %179, %186 : vector<16x128xf32>
      %208 = arith.subf %193, %207 : vector<16x128xf32>
      %209 = arith.mulf %208, %203 : vector<16x128xf32>
      %210 = arith.mulf %206, %30 : vector<16x128xf32>
      %211 = arith.mulf %206, %31 : vector<16x128xf32>
      %212 = arith.mulf %206, %32 : vector<16x128xf32>
      %213 = arith.mulf %209, %163 : vector<16x128xf32>
      %214 = arith.addf %124, %213 : vector<16x128xf32>
      %215 = arith.mulf %209, %164 : vector<16x128xf32>
      %216 = arith.addf %126, %215 : vector<16x128xf32>
      %217 = arith.mulf %209, %165 : vector<16x128xf32>
      %218 = arith.addf %128, %217 : vector<16x128xf32>
      %219 = arith.addf %210, %214 : vector<16x128xf32>
      %cst_61 = arith.constant 5.000000e-01 : f32
      %220 = vector.broadcast %cst_61 : f32 to vector<16x128xf32>
      %221 = arith.mulf %220, %219 : vector<16x128xf32>
      %222 = arith.addf %211, %216 : vector<16x128xf32>
      %cst_62 = arith.constant 5.000000e-01 : f32
      %223 = vector.broadcast %cst_62 : f32 to vector<16x128xf32>
      %224 = arith.mulf %223, %222 : vector<16x128xf32>
      %225 = arith.addf %212, %218 : vector<16x128xf32>
      %cst_63 = arith.constant 5.000000e-01 : f32
      %226 = vector.broadcast %cst_63 : f32 to vector<16x128xf32>
      %227 = arith.mulf %226, %225 : vector<16x128xf32>
      %228 = arith.subf %210, %214 : vector<16x128xf32>
      %229 = arith.mulf %228, %228 : vector<16x128xf32>
      %230 = arith.subf %211, %216 : vector<16x128xf32>
      %231 = arith.mulf %230, %230 : vector<16x128xf32>
      %232 = arith.addf %229, %231 : vector<16x128xf32>
      %233 = arith.subf %212, %218 : vector<16x128xf32>
      %234 = arith.mulf %233, %233 : vector<16x128xf32>
      %235 = arith.addf %232, %234 : vector<16x128xf32>
      %236 = math.sqrt %235 : vector<16x128xf32>
      %237 = math.absf %221 : vector<16x128xf32>
      %cst_64 = arith.constant 9.99999993E-9 : f32
      %238 = vector.broadcast %cst_64 : f32 to vector<16x128xf32>
      %239 = arith.cmpf olt, %237, %238 : vector<16x128xf32>
      %cst_65 = arith.constant 9.99999993E-9 : f32
      %240 = vector.broadcast %cst_65 : f32 to vector<16x128xf32>
      %241 = arith.select %239, %240, %221 : vector<16x128xi1>, vector<16x128xf32>
      %242 = tpu.reciprocal %241 {approx = true} : vector<16x128xf32> -> vector<16x128xf32>
      %243 = arith.mulf %241, %242 : vector<16x128xf32>
      %cst_66 = arith.constant 2.000000e+00 : f32
      %244 = vector.broadcast %cst_66 : f32 to vector<16x128xf32>
      %245 = arith.subf %244, %243 : vector<16x128xf32>
      %246 = arith.mulf %242, %245 : vector<16x128xf32>
      %cst_67 = arith.constant 2.000000e+01 : f32
      %247 = vector.broadcast %cst_67 : f32 to vector<16x128xf32>
      %248 = arith.mulf %247, %224 : vector<16x128xf32>
      %249 = arith.mulf %248, %246 : vector<16x128xf32>
      %cst_68 = arith.constant 8.000000e+00 : f32
      %250 = vector.broadcast %cst_68 : f32 to vector<16x128xf32>
      %251 = arith.addf %250, %249 : vector<16x128xf32>
      %cst_69 = arith.constant 2.000000e+01 : f32
      %252 = vector.broadcast %cst_69 : f32 to vector<16x128xf32>
      %253 = arith.mulf %252, %227 : vector<16x128xf32>
      %254 = arith.mulf %253, %246 : vector<16x128xf32>
      %cst_70 = arith.constant 8.000000e+00 : f32
      %255 = vector.broadcast %cst_70 : f32 to vector<16x128xf32>
      %256 = arith.addf %255, %254 : vector<16x128xf32>
      %257 = arith.subf %251, %7 : vector<16x128xf32>
      %258 = arith.mulf %257, %257 : vector<16x128xf32>
      %259 = arith.subf %256, %10 : vector<16x128xf32>
      %260 = arith.mulf %259, %259 : vector<16x128xf32>
      %261 = arith.addf %258, %260 : vector<16x128xf32>
      %262 = math.sqrt %261 : vector<16x128xf32>
      %cst_71 = arith.constant 5.000000e-01 : f32
      %263 = vector.broadcast %cst_71 : f32 to vector<16x128xf32>
      %264 = arith.mulf %263, %262 : vector<16x128xf32>
      %c0_72 = arith.constant 0 : index
      %265 = arith.index_cast %4 : i32 to index
      %c0_73 = arith.constant 0 : index
      %266 = vector.load %arg3[%c0_72, %265, %c0_73] : memref<16x32x128xf32, #tpu.memory_space<vmem>>, vector<1x16x128xf32>
      %267 = vector.shape_cast %266 : vector<1x16x128xf32> to vector<16x128xf32>
      %268 = vector.shape_cast %221 : vector<16x128xf32> to vector<1x16x128xf32>
      tpu.vector_store %arg3[%c0_72, %265, %c0_73], %268 {strides = array<i32>} : memref<16x32x128xf32, #tpu.memory_space<vmem>>, vector<1x16x128xf32>,
      %c2 = arith.constant 2 : index
      %269 = arith.index_cast %4 : i32 to index
      %c0_74 = arith.constant 0 : index
      %270 = vector.load %arg3[%c2, %269, %c0_74] : memref<16x32x128xf32, #tpu.memory_space<vmem>>, vector<1x16x128xf32>
      %271 = vector.shape_cast %270 : vector<1x16x128xf32> to vector<16x128xf32>
      %272 = vector.shape_cast %224 : vector<16x128xf32> to vector<1x16x128xf32>
      tpu.vector_store %arg3[%c2, %269, %c0_74], %272 {strides = array<i32>} : memref<16x32x128xf32, #tpu.memory_space<vmem>>, vector<1x16x128xf32>,
      %c4 = arith.constant 4 : index
      %273 = arith.index_cast %4 : i32 to index
      %c0_75 = arith.constant 0 : index
      %274 = vector.load %arg3[%c4, %273, %c0_75] : memref<16x32x128xf32, #tpu.memory_space<vmem>>, vector<1x16x128xf32>
      %275 = vector.shape_cast %274 : vector<1x16x128xf32> to vector<16x128xf32>
      %276 = vector.shape_cast %227 : vector<16x128xf32> to vector<1x16x128xf32>
      tpu.vector_store %arg3[%c4, %273, %c0_75], %276 {strides = array<i32>} : memref<16x32x128xf32, #tpu.memory_space<vmem>>, vector<1x16x128xf32>,
      %c6 = arith.constant 6 : index
      %277 = arith.index_cast %4 : i32 to index
      %c0_76 = arith.constant 0 : index
      %278 = vector.load %arg3[%c6, %277, %c0_76] : memref<16x32x128xf32, #tpu.memory_space<vmem>>, vector<1x16x128xf32>
      %279 = vector.shape_cast %278 : vector<1x16x128xf32> to vector<16x128xf32>
      %280 = vector.shape_cast %236 : vector<16x128xf32> to vector<1x16x128xf32>
      tpu.vector_store %arg3[%c6, %277, %c0_76], %280 {strides = array<i32>} : memref<16x32x128xf32, #tpu.memory_space<vmem>>, vector<1x16x128xf32>,
      %c8 = arith.constant 8 : index
      %281 = arith.index_cast %4 : i32 to index
      %c0_77 = arith.constant 0 : index
      %282 = vector.load %arg3[%c8, %281, %c0_77] : memref<16x32x128xf32, #tpu.memory_space<vmem>>, vector<1x16x128xf32>
      %283 = vector.shape_cast %282 : vector<1x16x128xf32> to vector<16x128xf32>
      %284 = vector.shape_cast %251 : vector<16x128xf32> to vector<1x16x128xf32>
      tpu.vector_store %arg3[%c8, %281, %c0_77], %284 {strides = array<i32>} : memref<16x32x128xf32, #tpu.memory_space<vmem>>, vector<1x16x128xf32>,
      %c10 = arith.constant 10 : index
      %285 = arith.index_cast %4 : i32 to index
      %c0_78 = arith.constant 0 : index
      %286 = vector.load %arg3[%c10, %285, %c0_78] : memref<16x32x128xf32, #tpu.memory_space<vmem>>, vector<1x16x128xf32>
      %287 = vector.shape_cast %286 : vector<1x16x128xf32> to vector<16x128xf32>
      %288 = vector.shape_cast %256 : vector<16x128xf32> to vector<1x16x128xf32>
      tpu.vector_store %arg3[%c10, %285, %c0_78], %288 {strides = array<i32>} : memref<16x32x128xf32, #tpu.memory_space<vmem>>, vector<1x16x128xf32>,
      %c12 = arith.constant 12 : index
      %289 = arith.index_cast %4 : i32 to index
      %c0_79 = arith.constant 0 : index
      %290 = vector.load %arg3[%c12, %289, %c0_79] : memref<16x32x128xf32, #tpu.memory_space<vmem>>, vector<1x16x128xf32>
      %291 = vector.shape_cast %290 : vector<1x16x128xf32> to vector<16x128xf32>
      %292 = vector.shape_cast %264 : vector<16x128xf32> to vector<1x16x128xf32>
      tpu.vector_store %arg3[%c12, %289, %c0_79], %292 {strides = array<i32>} : memref<16x32x128xf32, #tpu.memory_space<vmem>>, vector<1x16x128xf32>,
      %c14 = arith.constant 14 : index
      %293 = arith.index_cast %4 : i32 to index
      %c0_80 = arith.constant 0 : index
      %294 = vector.load %arg3[%c14, %293, %c0_80] : memref<16x32x128xf32, #tpu.memory_space<vmem>>, vector<1x16x128xf32>
      %295 = vector.shape_cast %294 : vector<1x16x128xf32> to vector<16x128xf32>
      %296 = vector.shape_cast %174 : vector<16x128xf32> to vector<1x16x128xf32>
      tpu.vector_store %arg3[%c14, %293, %c0_80], %296 {strides = array<i32>} : memref<16x32x128xf32, #tpu.memory_space<vmem>>, vector<1x16x128xf32>,
      %c2_81 = arith.constant 2 : index
      %297 = arith.index_cast %4 : i32 to index
      %c0_82 = arith.constant 0 : index
      %298 = vector.load %arg1[%c2_81, %297, %c0_82] : memref<4x32x128xf32, #tpu.memory_space<vmem>>, vector<1x16x128xf32>
      %299 = vector.shape_cast %298 : vector<1x16x128xf32> to vector<16x128xf32>
      %c3 = arith.constant 3 : index
      %300 = arith.index_cast %4 : i32 to index
      %c0_83 = arith.constant 0 : index
      %301 = vector.load %arg1[%c3, %300, %c0_83] : memref<4x32x128xf32, #tpu.memory_space<vmem>>, vector<1x16x128xf32>
      %302 = vector.shape_cast %301 : vector<1x16x128xf32> to vector<16x128xf32>
      %c2_84 = arith.constant 2 : index
      %303 = arith.index_cast %4 : i32 to index
      %c0_85 = arith.constant 0 : index
      %304 = vector.load %arg2[%c2_84, %303, %c0_85] : memref<4x32x128xf32, #tpu.memory_space<vmem>>, vector<1x16x128xf32>
      %305 = vector.shape_cast %304 : vector<1x16x128xf32> to vector<16x128xf32>
      %c3_86 = arith.constant 3 : index
      %306 = arith.index_cast %4 : i32 to index
      %c0_87 = arith.constant 0 : index
      %307 = vector.load %arg2[%c3_86, %306, %c0_87] : memref<4x32x128xf32, #tpu.memory_space<vmem>>, vector<1x16x128xf32>
      %308 = vector.shape_cast %307 : vector<1x16x128xf32> to vector<16x128xf32>
      %cst_88 = arith.constant 8.000000e+00 : f32
      %309 = vector.broadcast %cst_88 : f32 to vector<16x128xf32>
      %310 = arith.subf %299, %309 : vector<16x128xf32>
      %cst_89 = arith.constant 5.000000e-02 : f32
      %311 = vector.broadcast %cst_89 : f32 to vector<16x128xf32>
      %312 = arith.mulf %310, %311 : vector<16x128xf32>
      %cst_90 = arith.constant 8.000000e+00 : f32
      %313 = vector.broadcast %cst_90 : f32 to vector<16x128xf32>
      %314 = arith.subf %302, %313 : vector<16x128xf32>
      %cst_91 = arith.constant 5.000000e-02 : f32
      %315 = vector.broadcast %cst_91 : f32 to vector<16x128xf32>
      %316 = arith.mulf %314, %315 : vector<16x128xf32>
      %317 = arith.mulf %312, %312 : vector<16x128xf32>
      %cst_92 = arith.constant 1.000000e+00 : f32
      %318 = vector.broadcast %cst_92 : f32 to vector<16x128xf32>
      %319 = arith.addf %318, %317 : vector<16x128xf32>
      %320 = arith.mulf %316, %316 : vector<16x128xf32>
      %321 = arith.addf %319, %320 : vector<16x128xf32>
      %322 = math.rsqrt %321 : vector<16x128xf32>
      %323 = arith.mulf %312, %322 : vector<16x128xf32>
      %324 = arith.mulf %316, %322 : vector<16x128xf32>
      %cst_93 = arith.constant 8.000000e+00 : f32
      %325 = vector.broadcast %cst_93 : f32 to vector<16x128xf32>
      %326 = arith.subf %305, %325 : vector<16x128xf32>
      %cst_94 = arith.constant 5.000000e-02 : f32
      %327 = vector.broadcast %cst_94 : f32 to vector<16x128xf32>
      %328 = arith.mulf %326, %327 : vector<16x128xf32>
      %cst_95 = arith.constant 8.000000e+00 : f32
      %329 = vector.broadcast %cst_95 : f32 to vector<16x128xf32>
      %330 = arith.subf %308, %329 : vector<16x128xf32>
      %cst_96 = arith.constant 5.000000e-02 : f32
      %331 = vector.broadcast %cst_96 : f32 to vector<16x128xf32>
      %332 = arith.mulf %330, %331 : vector<16x128xf32>
      %333 = arith.mulf %328, %328 : vector<16x128xf32>
      %cst_97 = arith.constant 1.000000e+00 : f32
      %334 = vector.broadcast %cst_97 : f32 to vector<16x128xf32>
      %335 = arith.addf %334, %333 : vector<16x128xf32>
      %336 = arith.mulf %332, %332 : vector<16x128xf32>
      %337 = arith.addf %335, %336 : vector<16x128xf32>
      %338 = math.rsqrt %337 : vector<16x128xf32>
      %339 = arith.mulf %328, %338 : vector<16x128xf32>
      %340 = arith.mulf %332, %338 : vector<16x128xf32>
      %cst_98 = arith.constant 0.999500036 : f32
      %341 = vector.broadcast %cst_98 : f32 to vector<16x128xf32>
      %342 = arith.mulf %338, %341 : vector<16x128xf32>
      %cst_99 = arith.constant 0.00999533385 : f32
      %343 = vector.broadcast %cst_99 : f32 to vector<16x128xf32>
      %344 = arith.mulf %339, %343 : vector<16x128xf32>
      %345 = arith.addf %342, %344 : vector<16x128xf32>
      %cst_100 = arith.constant -2.999550e-02 : f32
      %346 = vector.broadcast %cst_100 : f32 to vector<16x128xf32>
      %347 = arith.mulf %340, %346 : vector<16x128xf32>
      %348 = arith.addf %345, %347 : vector<16x128xf32>
      %cst_101 = arith.constant 9.99999993E-9 : f32
      %349 = vector.broadcast %cst_101 : f32 to vector<16x128xf32>
      %350 = arith.maximumf %348, %349 : vector<16x128xf32>
      %351 = tpu.reciprocal %350 {approx = true} : vector<16x128xf32> -> vector<16x128xf32>
      %352 = arith.mulf %350, %351 : vector<16x128xf32>
      %cst_102 = arith.constant 2.000000e+00 : f32
      %353 = vector.broadcast %cst_102 : f32 to vector<16x128xf32>
      %354 = arith.subf %353, %352 : vector<16x128xf32>
      %355 = arith.mulf %351, %354 : vector<16x128xf32>
      %cst_103 = arith.constant 39.9750023 : f32
      %356 = vector.broadcast %cst_103 : f32 to vector<16x128xf32>
      %357 = arith.mulf %356, %355 : vector<16x128xf32>
      %358 = arith.mulf %357, %338 : vector<16x128xf32>
      %359 = arith.mulf %357, %339 : vector<16x128xf32>
      %360 = arith.mulf %357, %340 : vector<16x128xf32>
      %361 = arith.mulf %350, %350 : vector<16x128xf32>
      %cst_104 = arith.constant 1.000000e+00 : f32
      %362 = vector.broadcast %cst_104 : f32 to vector<16x128xf32>
      %363 = arith.subf %362, %361 : vector<16x128xf32>
      %cst_105 = arith.constant 0.438577265 : f32
      %364 = vector.broadcast %cst_105 : f32 to vector<16x128xf32>
      %365 = arith.mulf %364, %363 : vector<16x128xf32>
      %cst_106 = arith.constant 1.000000e+00 : f32
      %366 = vector.broadcast %cst_106 : f32 to vector<16x128xf32>
      %367 = arith.subf %366, %365 : vector<16x128xf32>
      %cst_107 = arith.constant 0.000000e+00 : f32
      %368 = vector.broadcast %cst_107 : f32 to vector<16x128xf32>
      %369 = arith.maximumf %367, %368 : vector<16x128xf32>
      %370 = math.sqrt %369 : vector<16x128xf32>
      %cst_108 = arith.constant 0.662251651 : f32
      %371 = vector.broadcast %cst_108 : f32 to vector<16x128xf32>
      %372 = arith.mulf %371, %350 : vector<16x128xf32>
      %373 = arith.subf %370, %372 : vector<16x128xf32>
      %cst_109 = arith.constant 0.662251651 : f32
      %374 = vector.broadcast %cst_109 : f32 to vector<16x128xf32>
      %375 = arith.mulf %374, %338 : vector<16x128xf32>
      %cst_110 = arith.constant 0.999500036 : f32
      %376 = vector.broadcast %cst_110 : f32 to vector<16x128xf32>
      %377 = arith.mulf %373, %376 : vector<16x128xf32>
      %378 = arith.addf %375, %377 : vector<16x128xf32>
      %cst_111 = arith.constant 0.662251651 : f32
      %379 = vector.broadcast %cst_111 : f32 to vector<16x128xf32>
      %380 = arith.mulf %379, %339 : vector<16x128xf32>
      %cst_112 = arith.constant 0.00999533385 : f32
      %381 = vector.broadcast %cst_112 : f32 to vector<16x128xf32>
      %382 = arith.mulf %373, %381 : vector<16x128xf32>
      %383 = arith.addf %380, %382 : vector<16x128xf32>
      %cst_113 = arith.constant 0.662251651 : f32
      %384 = vector.broadcast %cst_113 : f32 to vector<16x128xf32>
      %385 = arith.mulf %384, %340 : vector<16x128xf32>
      %cst_114 = arith.constant -2.999550e-02 : f32
      %386 = vector.broadcast %cst_114 : f32 to vector<16x128xf32>
      %387 = arith.mulf %373, %386 : vector<16x128xf32>
      %388 = arith.addf %385, %387 : vector<16x128xf32>
      %389 = arith.mulf %378, %378 : vector<16x128xf32>
      %390 = arith.mulf %383, %383 : vector<16x128xf32>
      %391 = arith.addf %389, %390 : vector<16x128xf32>
      %392 = arith.mulf %388, %388 : vector<16x128xf32>
      %393 = arith.addf %391, %392 : vector<16x128xf32>
      %394 = math.rsqrt %393 : vector<16x128xf32>
      %395 = arith.mulf %378, %394 : vector<16x128xf32>
      %396 = arith.mulf %383, %394 : vector<16x128xf32>
      %397 = arith.mulf %388, %394 : vector<16x128xf32>
      %cst_115 = arith.constant 0.999500036 : f32
      %398 = vector.broadcast %cst_115 : f32 to vector<16x128xf32>
      %399 = arith.mulf %395, %398 : vector<16x128xf32>
      %cst_116 = arith.constant 0.00999533385 : f32
      %400 = vector.broadcast %cst_116 : f32 to vector<16x128xf32>
      %401 = arith.mulf %396, %400 : vector<16x128xf32>
      %402 = arith.addf %399, %401 : vector<16x128xf32>
      %cst_117 = arith.constant -2.999550e-02 : f32
      %403 = vector.broadcast %cst_117 : f32 to vector<16x128xf32>
      %404 = arith.mulf %397, %403 : vector<16x128xf32>
      %405 = arith.addf %402, %404 : vector<16x128xf32>
      %cst_118 = arith.constant 9.99999993E-9 : f32
      %406 = vector.broadcast %cst_118 : f32 to vector<16x128xf32>
      %407 = arith.maximumf %405, %406 : vector<16x128xf32>
      %408 = tpu.reciprocal %407 {approx = true} : vector<16x128xf32> -> vector<16x128xf32>
      %409 = arith.mulf %407, %408 : vector<16x128xf32>
      %cst_119 = arith.constant 2.000000e+00 : f32
      %410 = vector.broadcast %cst_119 : f32 to vector<16x128xf32>
      %411 = arith.subf %410, %409 : vector<16x128xf32>
      %412 = arith.mulf %408, %411 : vector<16x128xf32>
      %cst_120 = arith.constant 2.000000e+01 : f32
      %413 = vector.broadcast %cst_120 : f32 to vector<16x128xf32>
      %414 = arith.mulf %413, %412 : vector<16x128xf32>
      %415 = arith.mulf %414, %395 : vector<16x128xf32>
      %416 = arith.addf %358, %415 : vector<16x128xf32>
      %417 = arith.mulf %414, %396 : vector<16x128xf32>
      %418 = arith.addf %359, %417 : vector<16x128xf32>
      %419 = arith.mulf %414, %397 : vector<16x128xf32>
      %420 = arith.addf %360, %419 : vector<16x128xf32>
      %421 = arith.mulf %407, %407 : vector<16x128xf32>
      %cst_121 = arith.constant 1.000000e+00 : f32
      %422 = vector.broadcast %cst_121 : f32 to vector<16x128xf32>
      %423 = arith.subf %422, %421 : vector<16x128xf32>
      %cst_122 = arith.constant 2.280100e+00 : f32
      %424 = vector.broadcast %cst_122 : f32 to vector<16x128xf32>
      %425 = arith.mulf %424, %423 : vector<16x128xf32>
      %cst_123 = arith.constant 1.000000e+00 : f32
      %426 = vector.broadcast %cst_123 : f32 to vector<16x128xf32>
      %427 = arith.subf %426, %425 : vector<16x128xf32>
      %cst_124 = arith.constant 0.000000e+00 : f32
      %428 = vector.broadcast %cst_124 : f32 to vector<16x128xf32>
      %429 = arith.maximumf %427, %428 : vector<16x128xf32>
      %430 = math.sqrt %429 : vector<16x128xf32>
      %cst_125 = arith.constant 1.510000e+00 : f32
      %431 = vector.broadcast %cst_125 : f32 to vector<16x128xf32>
      %432 = arith.mulf %431, %407 : vector<16x128xf32>
      %433 = arith.subf %430, %432 : vector<16x128xf32>
      %cst_126 = arith.constant 1.510000e+00 : f32
      %434 = vector.broadcast %cst_126 : f32 to vector<16x128xf32>
      %435 = arith.mulf %434, %395 : vector<16x128xf32>
      %cst_127 = arith.constant 0.999500036 : f32
      %436 = vector.broadcast %cst_127 : f32 to vector<16x128xf32>
      %437 = arith.mulf %433, %436 : vector<16x128xf32>
      %438 = arith.addf %435, %437 : vector<16x128xf32>
      %cst_128 = arith.constant 1.510000e+00 : f32
      %439 = vector.broadcast %cst_128 : f32 to vector<16x128xf32>
      %440 = arith.mulf %439, %396 : vector<16x128xf32>
      %cst_129 = arith.constant 0.00999533385 : f32
      %441 = vector.broadcast %cst_129 : f32 to vector<16x128xf32>
      %442 = arith.mulf %433, %441 : vector<16x128xf32>
      %443 = arith.addf %440, %442 : vector<16x128xf32>
      %cst_130 = arith.constant 1.510000e+00 : f32
      %444 = vector.broadcast %cst_130 : f32 to vector<16x128xf32>
      %445 = arith.mulf %444, %397 : vector<16x128xf32>
      %cst_131 = arith.constant -2.999550e-02 : f32
      %446 = vector.broadcast %cst_131 : f32 to vector<16x128xf32>
      %447 = arith.mulf %433, %446 : vector<16x128xf32>
      %448 = arith.addf %445, %447 : vector<16x128xf32>
      %449 = arith.mulf %438, %438 : vector<16x128xf32>
      %450 = arith.mulf %443, %443 : vector<16x128xf32>
      %451 = arith.addf %449, %450 : vector<16x128xf32>
      %452 = arith.mulf %448, %448 : vector<16x128xf32>
      %453 = arith.addf %451, %452 : vector<16x128xf32>
      %454 = math.rsqrt %453 : vector<16x128xf32>
      %455 = arith.mulf %438, %454 : vector<16x128xf32>
      %456 = arith.mulf %443, %454 : vector<16x128xf32>
      %457 = arith.mulf %448, %454 : vector<16x128xf32>
      %cst_132 = arith.constant 0.000000e+00 : f32
      %458 = vector.broadcast %cst_132 : f32 to vector<16x128xf32>
      %459 = arith.subf %458, %357 : vector<16x128xf32>
      %cst_133 = arith.constant 0.000000e+00 : f32
      %460 = vector.broadcast %cst_133 : f32 to vector<16x128xf32>
      %461 = arith.maximumf %459, %460 : vector<16x128xf32>
      %cst_134 = arith.constant 0.000000e+00 : f32
      %462 = vector.broadcast %cst_134 : f32 to vector<16x128xf32>
      %463 = arith.subf %462, %414 : vector<16x128xf32>
      %cst_135 = arith.constant 0.000000e+00 : f32
      %464 = vector.broadcast %cst_135 : f32 to vector<16x128xf32>
      %465 = arith.maximumf %463, %464 : vector<16x128xf32>
      %466 = arith.addf %461, %465 : vector<16x128xf32>
      %467 = arith.mulf %322, %455 : vector<16x128xf32>
      %468 = arith.mulf %323, %456 : vector<16x128xf32>
      %469 = arith.addf %467, %468 : vector<16x128xf32>
      %470 = arith.mulf %324, %457 : vector<16x128xf32>
      %471 = arith.addf %469, %470 : vector<16x128xf32>
      %472 = arith.mulf %322, %416 : vector<16x128xf32>
      %473 = arith.mulf %323, %418 : vector<16x128xf32>
      %474 = arith.addf %472, %473 : vector<16x128xf32>
      %475 = arith.mulf %324, %420 : vector<16x128xf32>
      %476 = arith.addf %474, %475 : vector<16x128xf32>
      %cst_136 = arith.constant 0.000000e+00 : f32
      %477 = vector.broadcast %cst_136 : f32 to vector<16x128xf32>
      %478 = arith.subf %477, %476 : vector<16x128xf32>
      %479 = arith.mulf %455, %416 : vector<16x128xf32>
      %480 = arith.mulf %456, %418 : vector<16x128xf32>
      %481 = arith.addf %479, %480 : vector<16x128xf32>
      %482 = arith.mulf %457, %420 : vector<16x128xf32>
      %483 = arith.addf %481, %482 : vector<16x128xf32>
      %cst_137 = arith.constant 0.000000e+00 : f32
      %484 = vector.broadcast %cst_137 : f32 to vector<16x128xf32>
      %485 = arith.subf %484, %483 : vector<16x128xf32>
      %486 = arith.mulf %471, %471 : vector<16x128xf32>
      %cst_138 = arith.constant 1.000000e+00 : f32
      %487 = vector.broadcast %cst_138 : f32 to vector<16x128xf32>
      %488 = arith.subf %487, %486 : vector<16x128xf32>
      %cst_139 = arith.constant 9.99999993E-9 : f32
      %489 = vector.broadcast %cst_139 : f32 to vector<16x128xf32>
      %490 = arith.maximumf %488, %489 : vector<16x128xf32>
      %491 = tpu.reciprocal %490 {approx = true} : vector<16x128xf32> -> vector<16x128xf32>
      %492 = arith.mulf %490, %491 : vector<16x128xf32>
      %cst_140 = arith.constant 2.000000e+00 : f32
      %493 = vector.broadcast %cst_140 : f32 to vector<16x128xf32>
      %494 = arith.subf %493, %492 : vector<16x128xf32>
      %495 = arith.mulf %491, %494 : vector<16x128xf32>
      %496 = arith.mulf %471, %485 : vector<16x128xf32>
      %497 = arith.subf %496, %478 : vector<16x128xf32>
      %498 = arith.mulf %497, %495 : vector<16x128xf32>
      %499 = arith.mulf %471, %478 : vector<16x128xf32>
      %500 = arith.subf %485, %499 : vector<16x128xf32>
      %501 = arith.mulf %500, %495 : vector<16x128xf32>
      %502 = arith.mulf %498, %322 : vector<16x128xf32>
      %503 = arith.mulf %498, %323 : vector<16x128xf32>
      %504 = arith.mulf %498, %324 : vector<16x128xf32>
      %505 = arith.mulf %501, %455 : vector<16x128xf32>
      %506 = arith.addf %416, %505 : vector<16x128xf32>
      %507 = arith.mulf %501, %456 : vector<16x128xf32>
      %508 = arith.addf %418, %507 : vector<16x128xf32>
      %509 = arith.mulf %501, %457 : vector<16x128xf32>
      %510 = arith.addf %420, %509 : vector<16x128xf32>
      %511 = arith.addf %502, %506 : vector<16x128xf32>
      %cst_141 = arith.constant 5.000000e-01 : f32
      %512 = vector.broadcast %cst_141 : f32 to vector<16x128xf32>
      %513 = arith.mulf %512, %511 : vector<16x128xf32>
      %514 = arith.addf %503, %508 : vector<16x128xf32>
      %cst_142 = arith.constant 5.000000e-01 : f32
      %515 = vector.broadcast %cst_142 : f32 to vector<16x128xf32>
      %516 = arith.mulf %515, %514 : vector<16x128xf32>
      %517 = arith.addf %504, %510 : vector<16x128xf32>
      %cst_143 = arith.constant 5.000000e-01 : f32
      %518 = vector.broadcast %cst_143 : f32 to vector<16x128xf32>
      %519 = arith.mulf %518, %517 : vector<16x128xf32>
      %520 = arith.subf %502, %506 : vector<16x128xf32>
      %521 = arith.mulf %520, %520 : vector<16x128xf32>
      %522 = arith.subf %503, %508 : vector<16x128xf32>
      %523 = arith.mulf %522, %522 : vector<16x128xf32>
      %524 = arith.addf %521, %523 : vector<16x128xf32>
      %525 = arith.subf %504, %510 : vector<16x128xf32>
      %526 = arith.mulf %525, %525 : vector<16x128xf32>
      %527 = arith.addf %524, %526 : vector<16x128xf32>
      %528 = math.sqrt %527 : vector<16x128xf32>
      %529 = math.absf %513 : vector<16x128xf32>
      %cst_144 = arith.constant 9.99999993E-9 : f32
      %530 = vector.broadcast %cst_144 : f32 to vector<16x128xf32>
      %531 = arith.cmpf olt, %529, %530 : vector<16x128xf32>
      %cst_145 = arith.constant 9.99999993E-9 : f32
      %532 = vector.broadcast %cst_145 : f32 to vector<16x128xf32>
      %533 = arith.select %531, %532, %513 : vector<16x128xi1>, vector<16x128xf32>
      %534 = tpu.reciprocal %533 {approx = true} : vector<16x128xf32> -> vector<16x128xf32>
      %535 = arith.mulf %533, %534 : vector<16x128xf32>
      %cst_146 = arith.constant 2.000000e+00 : f32
      %536 = vector.broadcast %cst_146 : f32 to vector<16x128xf32>
      %537 = arith.subf %536, %535 : vector<16x128xf32>
      %538 = arith.mulf %534, %537 : vector<16x128xf32>
      %cst_147 = arith.constant 2.000000e+01 : f32
      %539 = vector.broadcast %cst_147 : f32 to vector<16x128xf32>
      %540 = arith.mulf %539, %516 : vector<16x128xf32>
      %541 = arith.mulf %540, %538 : vector<16x128xf32>
      %cst_148 = arith.constant 8.000000e+00 : f32
      %542 = vector.broadcast %cst_148 : f32 to vector<16x128xf32>
      %543 = arith.addf %542, %541 : vector<16x128xf32>
      %cst_149 = arith.constant 2.000000e+01 : f32
      %544 = vector.broadcast %cst_149 : f32 to vector<16x128xf32>
      %545 = arith.mulf %544, %519 : vector<16x128xf32>
      %546 = arith.mulf %545, %538 : vector<16x128xf32>
      %cst_150 = arith.constant 8.000000e+00 : f32
      %547 = vector.broadcast %cst_150 : f32 to vector<16x128xf32>
      %548 = arith.addf %547, %546 : vector<16x128xf32>
      %549 = arith.subf %543, %299 : vector<16x128xf32>
      %550 = arith.mulf %549, %549 : vector<16x128xf32>
      %551 = arith.subf %548, %302 : vector<16x128xf32>
      %552 = arith.mulf %551, %551 : vector<16x128xf32>
      %553 = arith.addf %550, %552 : vector<16x128xf32>
      %554 = math.sqrt %553 : vector<16x128xf32>
      %cst_151 = arith.constant 5.000000e-01 : f32
      %555 = vector.broadcast %cst_151 : f32 to vector<16x128xf32>
      %556 = arith.mulf %555, %554 : vector<16x128xf32>
      %c1_152 = arith.constant 1 : index
      %557 = arith.index_cast %4 : i32 to index
      %c0_153 = arith.constant 0 : index
      %558 = vector.load %arg3[%c1_152, %557, %c0_153] : memref<16x32x128xf32, #tpu.memory_space<vmem>>, vector<1x16x128xf32>
      %559 = vector.shape_cast %558 : vector<1x16x128xf32> to vector<16x128xf32>
      %560 = vector.shape_cast %513 : vector<16x128xf32> to vector<1x16x128xf32>
      tpu.vector_store %arg3[%c1_152, %557, %c0_153], %560 {strides = array<i32>} : memref<16x32x128xf32, #tpu.memory_space<vmem>>, vector<1x16x128xf32>,
      %c3_154 = arith.constant 3 : index
      %561 = arith.index_cast %4 : i32 to index
      %c0_155 = arith.constant 0 : index
      %562 = vector.load %arg3[%c3_154, %561, %c0_155] : memref<16x32x128xf32, #tpu.memory_space<vmem>>, vector<1x16x128xf32>
      %563 = vector.shape_cast %562 : vector<1x16x128xf32> to vector<16x128xf32>
      %564 = vector.shape_cast %516 : vector<16x128xf32> to vector<1x16x128xf32>
      tpu.vector_store %arg3[%c3_154, %561, %c0_155], %564 {strides = array<i32>} : memref<16x32x128xf32, #tpu.memory_space<vmem>>, vector<1x16x128xf32>,
      %c5 = arith.constant 5 : index
      %565 = arith.index_cast %4 : i32 to index
      %c0_156 = arith.constant 0 : index
      %566 = vector.load %arg3[%c5, %565, %c0_156] : memref<16x32x128xf32, #tpu.memory_space<vmem>>, vector<1x16x128xf32>
      %567 = vector.shape_cast %566 : vector<1x16x128xf32> to vector<16x128xf32>
      %568 = vector.shape_cast %519 : vector<16x128xf32> to vector<1x16x128xf32>
      tpu.vector_store %arg3[%c5, %565, %c0_156], %568 {strides = array<i32>} : memref<16x32x128xf32, #tpu.memory_space<vmem>>, vector<1x16x128xf32>,
      %c7 = arith.constant 7 : index
      %569 = arith.index_cast %4 : i32 to index
      %c0_157 = arith.constant 0 : index
      %570 = vector.load %arg3[%c7, %569, %c0_157] : memref<16x32x128xf32, #tpu.memory_space<vmem>>, vector<1x16x128xf32>
      %571 = vector.shape_cast %570 : vector<1x16x128xf32> to vector<16x128xf32>
      %572 = vector.shape_cast %528 : vector<16x128xf32> to vector<1x16x128xf32>
      tpu.vector_store %arg3[%c7, %569, %c0_157], %572 {strides = array<i32>} : memref<16x32x128xf32, #tpu.memory_space<vmem>>, vector<1x16x128xf32>,
      %c9 = arith.constant 9 : index
      %573 = arith.index_cast %4 : i32 to index
      %c0_158 = arith.constant 0 : index
      %574 = vector.load %arg3[%c9, %573, %c0_158] : memref<16x32x128xf32, #tpu.memory_space<vmem>>, vector<1x16x128xf32>
      %575 = vector.shape_cast %574 : vector<1x16x128xf32> to vector<16x128xf32>
      %576 = vector.shape_cast %543 : vector<16x128xf32> to vector<1x16x128xf32>
      tpu.vector_store %arg3[%c9, %573, %c0_158], %576 {strides = array<i32>} : memref<16x32x128xf32, #tpu.memory_space<vmem>>, vector<1x16x128xf32>,
      %c11 = arith.constant 11 : index
      %577 = arith.index_cast %4 : i32 to index
      %c0_159 = arith.constant 0 : index
      %578 = vector.load %arg3[%c11, %577, %c0_159] : memref<16x32x128xf32, #tpu.memory_space<vmem>>, vector<1x16x128xf32>
      %579 = vector.shape_cast %578 : vector<1x16x128xf32> to vector<16x128xf32>
      %580 = vector.shape_cast %548 : vector<16x128xf32> to vector<1x16x128xf32>
      tpu.vector_store %arg3[%c11, %577, %c0_159], %580 {strides = array<i32>} : memref<16x32x128xf32, #tpu.memory_space<vmem>>, vector<1x16x128xf32>,
      %c13 = arith.constant 13 : index
      %581 = arith.index_cast %4 : i32 to index
      %c0_160 = arith.constant 0 : index
      %582 = vector.load %arg3[%c13, %581, %c0_160] : memref<16x32x128xf32, #tpu.memory_space<vmem>>, vector<1x16x128xf32>
      %583 = vector.shape_cast %582 : vector<1x16x128xf32> to vector<16x128xf32>
      %584 = vector.shape_cast %556 : vector<16x128xf32> to vector<1x16x128xf32>
      tpu.vector_store %arg3[%c13, %581, %c0_160], %584 {strides = array<i32>} : memref<16x32x128xf32, #tpu.memory_space<vmem>>, vector<1x16x128xf32>,
      %c15 = arith.constant 15 : index
      %585 = arith.index_cast %4 : i32 to index
      %c0_161 = arith.constant 0 : index
      %586 = vector.load %arg3[%c15, %585, %c0_161] : memref<16x32x128xf32, #tpu.memory_space<vmem>>, vector<1x16x128xf32>
      %587 = vector.shape_cast %586 : vector<1x16x128xf32> to vector<16x128xf32>
      %588 = vector.shape_cast %466 : vector<16x128xf32> to vector<1x16x128xf32>
      tpu.vector_store %arg3[%c15, %585, %c0_161], %588 {strides = array<i32>} : memref<16x32x128xf32, #tpu.memory_space<vmem>>, vector<1x16x128xf32>,
      %589 = arith.subf %221, %513 : vector<16x128xf32>
      %590 = arith.mulf %589, %589 : vector<16x128xf32>
      %591 = arith.subf %224, %516 : vector<16x128xf32>
      %592 = arith.mulf %591, %591 : vector<16x128xf32>
      %593 = arith.addf %590, %592 : vector<16x128xf32>
      %594 = arith.subf %227, %519 : vector<16x128xf32>
      %595 = arith.mulf %594, %594 : vector<16x128xf32>
      %596 = arith.addf %593, %595 : vector<16x128xf32>
      %597 = math.sqrt %596 : vector<16x128xf32>
      %598 = arith.index_cast %4 : i32 to index
      %c0_162 = arith.constant 0 : index
      %599 = vector.load %arg4[%598, %c0_162] : memref<32x128xf32, #tpu.memory_space<vmem>>, vector<16x128xf32>
      tpu.vector_store %arg4[%598, %c0_162], %597 {strides = array<i32>} : memref<32x128xf32, #tpu.memory_space<vmem>>, vector<16x128xf32>,
    }
    %c2_i32_0 = arith.constant 2 : i32
    return
  }
  func.func @transform_0(%arg0: i32) -> (i32, i32, i32) {
    %c0_i32 = arith.constant 0 : i32
    %c0_i32_0 = arith.constant 0 : i32
    %c0_i32_1 = arith.constant 0 : i32
    return %c0_i32, %arg0, %c0_i32_0 : i32, i32, i32
  }
  func.func @transform_1(%arg0: i32) -> (i32, i32, i32) {
    %c0_i32 = arith.constant 0 : i32
    %c0_i32_0 = arith.constant 0 : i32
    %c0_i32_1 = arith.constant 0 : i32
    return %c0_i32, %arg0, %c0_i32_0 : i32, i32, i32
  }
  func.func @transform_2(%arg0: i32) -> (i32, i32, i32) {
    %c0_i32 = arith.constant 0 : i32
    %c0_i32_0 = arith.constant 0 : i32
    %c0_i32_1 = arith.constant 0 : i32
    return %c0_i32, %arg0, %c0_i32_0 : i32, i32, i32
  }
  func.func @transform_3(%arg0: i32) -> (i32, i32) {
    %c0_i32 = arith.constant 0 : i32
    %c0_i32_0 = arith.constant 0 : i32
    return %arg0, %c0_i32 : i32, i32
  }
}

</mosaic_0001>

<llo_original>
// kernel: tpu_custom_call.1
$region0: #{tpu_custom_call.1}
  #allocation0 [shape = 'u32[]', space=smem, size = 0x4, offset = 0x4, fixed_abs, tag = 'smem constant byte address 0x4 - core index']
  #allocation1 [shape = 'u32[144,128]{1,0:T(1,128)}', space=vmem, size = 0x12000, scoped, tag = 'internal scratch']
  #allocation10 [shape = 's32[]', space=sflag, size = 0x4, offset = 0, fixed_abs, tag = 'sflag constant byte address 0x0 - dummy sync flag']
  #allocation12 [shape = 's32[]', space=sflag, size = 0x4, offset = 0, fixed_abs, tag = 'sflag constant byte address 0x0 - dummy sync flag']
  #allocation14 [shape = 's32[]', space=sflag, size = 0x4, offset = 0, fixed_abs, tag = 'sflag constant byte address 0x0 - dummy sync flag']
  %s0 = inlined_call_operand.hbm [shape: f32[4,64,128], index: 0, kind: input, shape index: {}]
  %s1 = inlined_call_operand.hbm [shape: f32[4,64,128], index: 1, kind: input, shape index: {}]
  %s2 = inlined_call_operand.hbm [shape: f32[16,64,128], index: 2, kind: output, shape index: {0}]
  %s3 = inlined_call_operand.hbm [shape: f32[64,128], index: 3, kind: output, shape index: {1}]
  %4 = xla_tuple %s2, %s3
  %s5 = sld [smem:[#allocation0]]
  $region64: #{tpu_custom_call.1} parent=0
    _
  %s7 = ssub.s32 1, %s5
  %s8 = scalar_select 0, %s7, %s5
  $region1: #{tpu_custom_call.1} parent=0
    #allocation2 [shape = 'u8[131072]{0}', space=vmem, size = 0x20000, scoped, tag = 'input window, operand 0']
    #allocation3 [shape = 's32[2]{0}', space=sflag, size = 0x8, scoped, tag = 'scoped memory for tpu_custom_call.1']
    #allocation4 [shape = 's32[2]{0}', space=sflag, size = 0x8, scoped, tag = 'scoped memory for tpu_custom_call.1']
    #allocation5 [shape = 'u8[131072]{0}', space=vmem, size = 0x20000, scoped, tag = 'input window, operand 1']
    #allocation6 [shape = 's32[2]{0}', space=sflag, size = 0x8, scoped, tag = 'scoped memory for tpu_custom_call.1']
    #allocation7 [shape = 'u8[524288]{0}', space=vmem, size = 0x80000, scoped, tag = 'output window, operand 0']
    #allocation8 [shape = 'u8[32768]{0}', space=vmem, size = 0x8000, scoped, tag = 'output window, operand 1']
    #allocation9 [shape = 's32[2]{0}', space=sflag, size = 0x8, scoped, tag = 'scoped memory for tpu_custom_call.1']
    %9 = vsyncpa [#allocation3], 0
    %s10 = scalar_lea.sflag [#allocation3], 1
    %11 = vsyncpa %s10, 0
    %12 = vsyncpa [#allocation6], 0
    %s13 = scalar_lea.sflag [#allocation6], 1
    %14 = vsyncpa %s13, 0
    %15 = vsyncpa [#allocation4], 0
    %s16 = scalar_lea.sflag [#allocation4], 1
    %17 = vsyncpa %s16, 0
    %18 = vsyncpa [#allocation9], 0
    %s19 = scalar_lea.sflag [#allocation9], 1
    %20 = vsyncpa %s19, 0
    loop: start=0, step=1, limit=4
    $region2: #{tpu_custom_call.1} parent=1 // loop_pre_header
      _
    $region3: #{tpu_custom_call.1} parent=1 // loop_header
      %s22 = sphi 0, %s26
      %p23 = scmp.ge.s32.totalorder %s22, 4
      %s32 = sphi 0, %s34
      %s35 = sphi 0, %s32
      %s36 = sphi 0, %s35
      %s52 = sphi 0, %s36
      %s58 = sphi 0, %s60
      %s61 = sphi 0, %s58
      %s62 = sphi 0, %s61
      %s78 = sphi 0, %s62
      %s84 = sphi 0, %s86
      %s87 = sphi 0, %s84
      %s88 = sphi 0, %s87
      %s104 = sphi 0, %s88
      %s110 = sphi 0, %s112
      %s113 = sphi 0, %s110
      %s114 = sphi 0, %s113
      %s130 = sphi 0, %s114
    $region4: #{tpu_custom_call.1} parent=1 // loop_header_branch
      %25 = sbr.rel (%p23) target = $region8
    $region5: #{tpu_custom_call.1} parent=1 // loop_body
      %s27 = ssub.s32 %s22, 1
      %s28 = ssub.s32 %s22, 2
      %s29 = sadd.s32 %s22, 1
      %s30 = ssub.s32 %s22, %s29
      %p31 = scmp.eq.s32.totalorder %s30, 0
      %s33 = sadd.s32 %s32, 1
      %s34 = scalar_select %p31, %s32, %s33
      %p37 = pneg %p31
      %p38 = scmp.eq.s32.totalorder %s22, 1
      %p39 = por %p37, %p38
      %p40 = scmp.ne.s32.totalorder %s32, %s35
      %p41 = scmp.eq.s32.totalorder %s22, 0
      %p42 = por %p40, %p41
      %p43 = scmp.ne.s32.totalorder %s32, %s35
      %p44 = scmp.eq.s32.totalorder %s27, 1
      %p45 = por %p43, %p44
      %p46 = scmp.ne.s32.totalorder %s35, %s36
      %p47 = scmp.eq.s32.totalorder %s27, 0
      %p48 = por %p46, %p47
      %p49 = scmp.ne.s32.totalorder %s35, %s36
      %p50 = scmp.eq.s32.totalorder %s28, 1
      %p51 = por %p49, %p50
      %p53 = scmp.ne.s32.totalorder %s36, %s52
      %p54 = scmp.eq.s32.totalorder %s28, 0
      %p55 = por %p53, %p54
      %s56 = ssub.s32 %s22, %s29
      %p57 = scmp.eq.s32.totalorder %s56, 0
      %s59 = sadd.s32 %s58, 1
      %s60 = scalar_select %p57, %s58, %s59
      %p63 = pneg %p57
      %p64 = scmp.eq.s32.totalorder %s22, 1
      %p65 = por %p63, %p64
      %p66 = scmp.ne.s32.totalorder %s58, %s61
      %p67 = scmp.eq.s32.totalorder %s22, 0
      %p68 = por %p66, %p67
      %p69 = scmp.ne.s32.totalorder %s58, %s61
      %p70 = scmp.eq.s32.totalorder %s27, 1
      %p71 = por %p69, %p70
      %p72 = scmp.ne.s32.totalorder %s61, %s62
      %p73 = scmp.eq.s32.totalorder %s27, 0
      %p74 = por %p72, %p73
      %p75 = scmp.ne.s32.totalorder %s61, %s62
      %p76 = scmp.eq.s32.totalorder %s28, 1
      %p77 = por %p75, %p76
      %p79 = scmp.ne.s32.totalorder %s62, %s78
      %p80 = scmp.eq.s32.totalorder %s28, 0
      %p81 = por %p79, %p80
      %s82 = ssub.s32 %s22, %s29
      %p83 = scmp.eq.s32.totalorder %s82, 0
      %s85 = sadd.s32 %s84, 1
      %s86 = scalar_select %p83, %s84, %s85
      %p89 = pneg %p83
      %p90 = scmp.eq.s32.totalorder %s22, 1
      %p91 = por %p89, %p90
      %p92 = scmp.ne.s32.totalorder %s84, %s87
      %p93 = scmp.eq.s32.totalorder %s22, 0
      %p94 = por %p92, %p93
      %p95 = scmp.ne.s32.totalorder %s84, %s87
      %p96 = scmp.eq.s32.totalorder %s27, 1
      %p97 = por %p95, %p96
      %p98 = scmp.ne.s32.totalorder %s87, %s88
      %p99 = scmp.eq.s32.totalorder %s27, 0
      %p100 = por %p98, %p99
      %p101 = scmp.ne.s32.totalorder %s87, %s88
      %p102 = scmp.eq.s32.totalorder %s28, 1
      %p103 = por %p101, %p102
      %p105 = scmp.ne.s32.totalorder %s88, %s104
      %p106 = scmp.eq.s32.totalorder %s28, 0
      %p107 = por %p105, %p106
      %s108 = ssub.s32 %s22, %s29
      %p109 = scmp.eq.s32.totalorder %s108, 0
      %s111 = sadd.s32 %s110, 1
      %s112 = scalar_select %p109, %s110, %s111
      %p115 = pneg %p109
      %p116 = scmp.eq.s32.totalorder %s22, 1
      %p117 = por %p115, %p116
      %p118 = scmp.ne.s32.totalorder %s110, %s113
      %p119 = scmp.eq.s32.totalorder %s22, 0
      %p120 = por %p118, %p119
      %p121 = scmp.ne.s32.totalorder %s110, %s113
      %p122 = scmp.eq.s32.totalorder %s27, 1
      %p123 = por %p121, %p122
      %p124 = scmp.ne.s32.totalorder %s113, %s114
      %p125 = scmp.eq.s32.totalorder %s27, 0
      %p126 = por %p124, %p125
      %p127 = scmp.ne.s32.totalorder %s113, %s114
      %p128 = scmp.eq.s32.totalorder %s28, 1
      %p129 = por %p127, %p128
      %p131 = scmp.ne.s32.totalorder %s114, %s130
      %p132 = scmp.eq.s32.totalorder %s28, 0
      %p133 = por %p131, %p132
      %p134 = scmp.le.s32.totalorder 1, %s22
      %p135 = scmp.lt.s32.totalorder %s22, 3
      %p136 = pnand %p134, %p135
      %p137 = pneg %p136
      // Predicated region
      $region9: #{tpu_custom_call.1} parent=5 // pred_check
        _
      $region10: #{tpu_custom_call.1} parent=5 // pred_check_branch
        %139 = sbr.rel (%p136) target = $region12
      $region11: #{tpu_custom_call.1} parent=5 // pred_region
        %s140 = ssub.s32 %s22, 1
      $region12: #{tpu_custom_call.1} parent=5 // pred_fallthru
        _
      %p141 = scmp.lt.s32.totalorder %s22, 2
      // Predicated region
      $region13: #{tpu_custom_call.1} parent=5 // pred_check
        %p142 = pneg %p141
      $region14: #{tpu_custom_call.1} parent=5 // pred_check_branch
        %144 = sbr.rel (%p142) target = $region16
      $region15: #{tpu_custom_call.1} parent=5 // pred_region
        // Predicated region
        $region17: #{tpu_custom_call.1} parent=15 // pred_check
          %p145 = pneg %p42
        $region18: #{tpu_custom_call.1} parent=15 // pred_check_branch
          %147 = sbr.rel (%p145) target = $region20
        $region19: #{tpu_custom_call.1} parent=15 // pred_region
          #allocation11 [shape = 'u32[6]{0}', space=smem, size = 0x18, scoped, tag = 'DMA stride descriptor']
          %s148 = sand.u32 %s32, 1
          %s149 = scalar_lea.sflag [#allocation3], %s148
          %s150 = sand.u32 %s32, 1
          %s151 = smul.addr %s150, 128
          %s152 = scalar_lea.vmem [#allocation2], %s151
          %s153 = smul.u32 4, %s22
          %s155 = ssub.s32 2048, 2048
          %156 = vsyncadd %s149, %s155
          %s157 = smul.addr %s153, 128
          %s158 = scalar_lea.hbm %s0, %s157
          %s160 = sshll.u32 1, 14
          %s161 = sxor.u32 4294967295, %s160
          %s163 = sld [smem:[#allocation0]]
          %s164 = sadd.s32 2, %s163
          %s166 = sshll.u32 7, 26
          %s167 = sxor.u32 4294967295, %s166
          %s168 = sand.u32 0, %s167
          %s169 = sshll.u32 %s164, 26
          %s170 = sor.u32 %s168, %s169
          %s171 = sshll.u32 %s152, 4
          %s172 = int_to_ptr.vmem [resolvable:$true] %s171
          %178 = sst [smem:[#allocation11]] 1024
          %s179 = scalar_lea.smem [#allocation11], 1
          %180 = sst [smem:[%s179]] 512
          %s181 = scalar_lea.smem [#allocation11], 2
          %182 = sst [smem:[%s181]] 4
          %s183 = scalar_lea.smem [#allocation11], 3
          %184 = sst [smem:[%s183]] 128
          %s185 = scalar_lea.smem [#allocation11], 4
          %186 = sst [smem:[%s185]] 128
          %s187 = scalar_lea.smem [#allocation11], 5
          %188 = sst [smem:[%s187]] 8
          %190 = dma.general %s158, 2048, %s172, %s149, [#allocation10], [#allocation11], %s170, 0
        $region20: #{tpu_custom_call.1} parent=15 // pred_fallthru
          _
        // Predicated region
        $region21: #{tpu_custom_call.1} parent=15 // pred_check
          %p191 = pneg %p68
        $region22: #{tpu_custom_call.1} parent=15 // pred_check_branch
          %193 = sbr.rel (%p191) target = $region24
        $region23: #{tpu_custom_call.1} parent=15 // pred_region
          #allocation13 [shape = 'u32[6]{0}', space=smem, size = 0x18, scoped, tag = 'DMA stride descriptor']
          %s194 = sand.u32 %s58, 1
          %s195 = scalar_lea.sflag [#allocation6], %s194
          %s196 = sand.u32 %s58, 1
          %s197 = smul.addr %s196, 128
          %s198 = scalar_lea.vmem [#allocation5], %s197
          %s199 = smul.u32 4, %s22
          %s201 = ssub.s32 2048, 2048
          %202 = vsyncadd %s195, %s201
          %s203 = smul.addr %s199, 128
          %s204 = scalar_lea.hbm %s1, %s203
          %s206 = sshll.u32 1, 14
          %s207 = sxor.u32 4294967295, %s206
          %s209 = sld [smem:[#allocation0]]
          %s210 = sadd.s32 2, %s209
          %s212 = sshll.u32 7, 26
          %s213 = sxor.u32 4294967295, %s212
          %s214 = sand.u32 0, %s213
          %s215 = sshll.u32 %s210, 26
          %s216 = sor.u32 %s214, %s215
          %s217 = sshll.u32 %s198, 4
          %s218 = int_to_ptr.vmem [resolvable:$true] %s217
          %224 = sst [smem:[#allocation13]] 1024
          %s225 = scalar_lea.smem [#allocation13], 1
          %226 = sst [smem:[%s225]] 512
          %s227 = scalar_lea.smem [#allocation13], 2
          %228 = sst [smem:[%s227]] 4
          %s229 = scalar_lea.smem [#allocation13], 3
          %230 = sst [smem:[%s229]] 128
          %s231 = scalar_lea.smem [#allocation13], 4
          %232 = sst [smem:[%s231]] 128
          %s233 = scalar_lea.smem [#allocation13], 5
          %234 = sst [smem:[%s233]] 8
          %236 = dma.general %s204, 2048, %s218, %s195, [#allocation12], [#allocation13], %s216, 0
        $region24: #{tpu_custom_call.1} parent=15 // pred_fallthru
          _
      $region16: #{tpu_custom_call.1} parent=5 // pred_fallthru
        _
      %p237 = scmp.le.s32.totalorder 1, %s22
      %p238 = scmp.lt.s32.totalorder %s22, 3
      %p239 = pnand %p237, %p238
      %p240 = pneg %p239
      // Predicated region
      $region25: #{tpu_custom_call.1} parent=5 // pred_check
        _
      $region26: #{tpu_custom_call.1} parent=5 // pred_check_branch
        %242 = sbr.rel (%p239) target = $region28
      $region27: #{tpu_custom_call.1} parent=5 // pred_region
        %s243 = ssub.s32 %s22, 1
        %s244 = sand.u32 %s35, 1
        %s245 = scalar_lea.sflag [#allocation3], %s244
        %s246 = sand.u32 %s35, 1
        %s247 = smul.addr %s246, 128
        %s248 = scalar_lea.vmem [#allocation2], %s247
        // Predicated region
        $region29: #{tpu_custom_call.1} parent=27 // pred_check
          %p249 = pneg %p48
        $region30: #{tpu_custom_call.1} parent=27 // pred_check_branch
          %251 = sbr.rel (%p249) target = $region32
        $region31: #{tpu_custom_call.1} parent=27 // pred_region
          %252 = dma.done %s245, 2048
        $region32: #{tpu_custom_call.1} parent=27 // pred_fallthru
          _
        %s253 = sand.u32 %s61, 1
        %s254 = scalar_lea.sflag [#allocation6], %s253
        %s255 = sand.u32 %s61, 1
        %s256 = smul.addr %s255, 128
        %s257 = scalar_lea.vmem [#allocation5], %s256
        // Predicated region
        $region33: #{tpu_custom_call.1} parent=27 // pred_check
          %p258 = pneg %p74
        $region34: #{tpu_custom_call.1} parent=27 // pred_check_branch
          %260 = sbr.rel (%p258) target = $region36
        $region35: #{tpu_custom_call.1} parent=27 // pred_region
          %261 = dma.done %s254, 2048
        $region36: #{tpu_custom_call.1} parent=27 // pred_fallthru
          _
        %s262 = sand.u32 %s35, 1
        %s263 = scalar_lea.sflag [#allocation3], %s262
        %s264 = sand.u32 %s35, 1
        %s265 = smul.addr %s264, 128
        %s266 = scalar_lea.vmem [#allocation2], %s265
        %p267 = pneg %p48
        %p268 = pneg %p45
        %s269 = sand.u32 %s61, 1
        %s270 = scalar_lea.sflag [#allocation6], %s269
        %s271 = sand.u32 %s61, 1
        %s272 = smul.addr %s271, 128
        %s273 = scalar_lea.vmem [#allocation5], %s272
        %p274 = pneg %p74
        %p275 = pneg %p71
        %p276 = pneg %p100
        %p277 = pneg %p97
        %s278 = sand.u32 %s87, 1
        %s279 = scalar_lea.sflag [#allocation4], %s278
        %s280 = sand.u32 %s87, 1
        %s281 = smul.addr %s280, 512
        %s282 = scalar_lea.vmem [#allocation7], %s281
        %p283 = pneg %p126
        %p284 = pneg %p123
        %s285 = sand.u32 %s113, 1
        %s286 = scalar_lea.sflag [#allocation9], %s285
        %s287 = sand.u32 %s113, 1
        %s288 = smul.addr %s287, 32
        %s289 = scalar_lea.vmem [#allocation8], %s288
        %s290 = smul.u32 4, %s27
        %s291 = smul.u32 4, %s27
        %s292 = smul.u32 4, %s27
        %s293 = smul.u32 4, %s27
        loop: start=0, step=1, limit=2
        $region37: #{tpu_custom_call.1} parent=27 // loop_pre_header
          _
        $region38: #{tpu_custom_call.1} parent=27 // loop_header
          %s295 = sphi 0, %s299
          %p296 = scmp.ge.s32.totalorder %s295, 2
        $region39: #{tpu_custom_call.1} parent=27 // loop_header_branch
          %298 = sbr.rel (%p296) target = $region43
        $region40: #{tpu_custom_call.1} parent=27 // loop_body
          %s300 = smul.u32 %s295, 16
          %s301 = scalar_lea.vmem %s248, %s300 [#allocation2]
          %v302 = vld [vmem:[%s301] sm:$0xff]
          %v303 = vld [vmem:[%s301 + $0x8] sm:$0xff]
          %s304 = sadd.s32 %s300, 32
          %s305 = scalar_lea.vmem %s248, %s304 [#allocation2]
          %v306 = vld [vmem:[%s305] sm:$0xff]
          %v307 = vld [vmem:[%s305 + $0x8] sm:$0xff]
          %s308 = scalar_lea.vmem %s257, %s300 [#allocation5]
          %v309 = vld [vmem:[%s308] sm:$0xff]
          %v310 = vld [vmem:[%s308 + $0x8] sm:$0xff]
          %s311 = scalar_lea.vmem %s257, %s304 [#allocation5]
          %v312 = vld [vmem:[%s311] sm:$0xff]
          %v313 = vld [vmem:[%s311 + $0x8] sm:$0xff]
          %v314 = vsub.f32 %v302, 8.0
          %v315 = vsub.f32 %v303, 8.0
          %v316 = vmul.f32 %v314, 0.05
          %v317 = vmul.f32 %v315, 0.05
          %v318 = vsub.f32 %v306, 8.0
          %v319 = vsub.f32 %v307, 8.0
          %v320 = vmul.f32 %v318, 0.05
          %v321 = vmul.f32 %v319, 0.05
          %v322 = vmul.f32 %v316, %v316
          %v323 = vmul.f32 %v317, %v317
          %v324 = vadd.f32 %v322, 1.0
          %v325 = vadd.f32 %v323, 1.0
          %v326 = vmul.f32 %v320, %v320
          %v327 = vmul.f32 %v321, %v321
          %v328 = vadd.f32 %v324, %v326
          %v329 = vadd.f32 %v325, %v327
          %v330 = vrsqrt.pop %v328
          %v331 = vrsqrt.pop %v329
          %v332 = vmul.f32 %v316, %v330
          %v333 = vmul.f32 %v317, %v331
          %v334 = vmul.f32 %v320, %v330
          %v335 = vmul.f32 %v321, %v331
          %v336 = vsub.f32 %v309, 8.0
          %v337 = vsub.f32 %v310, 8.0
          %v338 = vmul.f32 %v336, 0.05
          %v339 = vmul.f32 %v337, 0.05
          %v340 = vsub.f32 %v312, 8.0
          %v341 = vsub.f32 %v313, 8.0
          %v342 = vmul.f32 %v340, 0.05
          %v343 = vmul.f32 %v341, 0.05
          %v344 = vmul.f32 %v338, %v338
          %v345 = vmul.f32 %v339, %v339
          %v346 = vadd.f32 %v344, 1.0
          %v347 = vadd.f32 %v345, 1.0
          %v348 = vmul.f32 %v342, %v342
          %v349 = vmul.f32 %v343, %v343
          %v350 = vadd.f32 %v346, %v348
          %v351 = vadd.f32 %v347, %v349
          %v352 = vrsqrt.pop %v350
          %v353 = vrsqrt.pop %v351
          %v354 = vmul.f32 %v338, %v352
          %v355 = vmul.f32 %v339, %v353
          %v356 = vmul.f32 %v342, %v352
          %v357 = vmul.f32 %v343, %v353
          %v358 = vmul.f32 %v352, 0.99950004
          %v359 = vmul.f32 %v353, 0.99950004
          %v360 = vmul.f32 %v354, 0.009995334
          %v361 = vmul.f32 %v355, 0.009995334
          %v362 = vadd.f32 %v358, %v360
          %v363 = vadd.f32 %v359, %v361
          %v364 = vmul.f32 %v356, -0.0299955
          %v365 = vmul.f32 %v357, -0.0299955
          %v366 = vadd.f32 %v362, %v364
          %v367 = vadd.f32 %v363, %v365
          %v368 = vmax.f32 %v366, 1e-08
          %v369 = vmax.f32 %v367, 1e-08
          %v370 = vrcp.pop %v368
          %v371 = vrcp.pop %v369
          %v372 = vmul.f32 %v368, %v370
          %v373 = vmul.f32 %v369, %v371
          %v374 = vsub.f32 2.0, %v372
          %v375 = vsub.f32 2.0, %v373
          %v376 = vmul.f32 %v370, %v374
          %v377 = vmul.f32 %v371, %v375
          %v378 = vmul.f32 %v376, 39.975002
          %v379 = vmul.f32 %v377, 39.975002
          %v380 = vmul.f32 %v378, %v352
          %v381 = vmul.f32 %v379, %v353
          %v382 = vmul.f32 %v378, %v354
          %v383 = vmul.f32 %v379, %v355
          %v384 = vmul.f32 %v378, %v356
          %v385 = vmul.f32 %v379, %v357
          %v386 = vmul.f32 %v368, %v368
          %v387 = vmul.f32 %v369, %v369
          %v388 = vsub.f32 1.0, %v386
          %v389 = vsub.f32 1.0, %v387
          %v390 = vmul.f32 %v388, 0.43857726
          %v391 = vmul.f32 %v389, 0.43857726
          %v392 = vsub.f32 1.0, %v390
          %v393 = vsub.f32 1.0, %v391
          %v394 = vmax.f32 %v392, 0.0
          %v395 = vmax.f32 %v393, 0.0
          %v396 = vrsqrt.pop %v394
          %v397 = vmul.f32 %v394, %v396
          %vm398 = vcmp.eq.f32.partialorder %v394, inf
          %v399 = vsel %vm398, %v394, %v397
          %vm400 = vcmp.eq.f32.partialorder %v394, 0.0
          %v401 = vand.u32 %v394, 2147483648
          %v402 = vsel %vm400, %v401, %v399
          %v403 = vrsqrt.pop %v395
          %v404 = vmul.f32 %v395, %v403
          %vm405 = vcmp.eq.f32.partialorder %v395, inf
          %v406 = vsel %vm405, %v395, %v404
          %vm407 = vcmp.eq.f32.partialorder %v395, 0.0
          %v408 = vand.u32 %v395, 2147483648
          %v409 = vsel %vm407, %v408, %v406
          %v410 = vmul.f32 %v368, 0.66225165
          %v411 = vmul.f32 %v369, 0.66225165
          %v412 = vsub.f32 %v402, %v410
          %v413 = vsub.f32 %v409, %v411
          %v414 = vmul.f32 %v352, 0.66225165
          %v415 = vmul.f32 %v353, 0.66225165
          %v416 = vmul.f32 %v412, 0.99950004
          %v417 = vmul.f32 %v413, 0.99950004
          %v418 = vadd.f32 %v414, %v416
          %v419 = vadd.f32 %v415, %v417
          %v420 = vmul.f32 %v354, 0.66225165
          %v421 = vmul.f32 %v355, 0.66225165
          %v422 = vmul.f32 %v412, 0.009995334
          %v423 = vmul.f32 %v413, 0.009995334
          %v424 = vadd.f32 %v420, %v422
          %v425 = vadd.f32 %v421, %v423
          %v426 = vmul.f32 %v356, 0.66225165
          %v427 = vmul.f32 %v357, 0.66225165
          %v428 = vmul.f32 %v412, -0.0299955
          %v429 = vmul.f32 %v413, -0.0299955
          %v430 = vadd.f32 %v426, %v428
          %v431 = vadd.f32 %v427, %v429
          %v432 = vmul.f32 %v418, %v418
          %v433 = vmul.f32 %v419, %v419
          %v434 = vmul.f32 %v424, %v424
          %v435 = vmul.f32 %v425, %v425
          %v436 = vadd.f32 %v432, %v434
          %v437 = vadd.f32 %v433, %v435
          %v438 = vmul.f32 %v430, %v430
          %v439 = vmul.f32 %v431, %v431
          %v440 = vadd.f32 %v436, %v438
          %v441 = vadd.f32 %v437, %v439
          %v442 = vrsqrt.pop %v440
          %v443 = vrsqrt.pop %v441
          %v444 = vmul.f32 %v418, %v442
          %v445 = vmul.f32 %v419, %v443
          %v446 = vmul.f32 %v424, %v442
          %v447 = vmul.f32 %v425, %v443
          %v448 = vmul.f32 %v430, %v442
          %v449 = vmul.f32 %v431, %v443
          %v450 = vmul.f32 %v444, 0.99950004
          %v451 = vmul.f32 %v445, 0.99950004
          %v452 = vmul.f32 %v446, 0.009995334
          %v453 = vmul.f32 %v447, 0.009995334
          %v454 = vadd.f32 %v450, %v452
          %v455 = vadd.f32 %v451, %v453
          %v456 = vmul.f32 %v448, -0.0299955
          %v457 = vmul.f32 %v449, -0.0299955
          %v458 = vadd.f32 %v454, %v456
          %v459 = vadd.f32 %v455, %v457
          %v460 = vmax.f32 %v458, 1e-08
          %v461 = vmax.f32 %v459, 1e-08
          %v462 = vrcp.pop %v460
          %v463 = vrcp.pop %v461
          %v464 = vmul.f32 %v460, %v462
          %v465 = vmul.f32 %v461, %v463
          %v466 = vsub.f32 2.0, %v464
          %v467 = vsub.f32 2.0, %v465
          %v468 = vmul.f32 %v462, %v466
          %v469 = vmul.f32 %v463, %v467
          %v470 = vmul.f32 %v468, 20.0
          %v471 = vmul.f32 %v469, 20.0
          %v472 = vmul.f32 %v470, %v444
          %v473 = vmul.f32 %v471, %v445
          %v474 = vadd.f32 %v380, %v472
          %v475 = vadd.f32 %v381, %v473
          %v476 = vmul.f32 %v470, %v446
          %v477 = vmul.f32 %v471, %v447
          %v478 = vadd.f32 %v382, %v476
          %v479 = vadd.f32 %v383, %v477
          %v480 = vmul.f32 %v470, %v448
          %v481 = vmul.f32 %v471, %v449
          %v482 = vadd.f32 %v384, %v480
          %v483 = vadd.f32 %v385, %v481
          %v484 = vmul.f32 %v460, %v460
          %v485 = vmul.f32 %v461, %v461
          %v486 = vsub.f32 1.0, %v484
          %v487 = vsub.f32 1.0, %v485
          %v488 = vmul.f32 %v486, 2.2801
          %v489 = vmul.f32 %v487, 2.2801
          %v490 = vsub.f32 1.0, %v488
          %v491 = vsub.f32 1.0, %v489
          %v492 = vmax.f32 %v490, 0.0
          %v493 = vmax.f32 %v491, 0.0
          %v494 = vrsqrt.pop %v492
          %v495 = vmul.f32 %v492, %v494
          %vm496 = vcmp.eq.f32.partialorder %v492, inf
          %v497 = vsel %vm496, %v492, %v495
          %vm498 = vcmp.eq.f32.partialorder %v492, 0.0
          %v499 = vand.u32 %v492, 2147483648
          %v500 = vsel %vm498, %v499, %v497
          %v501 = vrsqrt.pop %v493
          %v502 = vmul.f32 %v493, %v501
          %vm503 = vcmp.eq.f32.partialorder %v493, inf
          %v504 = vsel %vm503, %v493, %v502
          %vm505 = vcmp.eq.f32.partialorder %v493, 0.0
          %v506 = vand.u32 %v493, 2147483648
          %v507 = vsel %vm505, %v506, %v504
          %v508 = vmul.f32 %v460, 1.51
          %v509 = vmul.f32 %v461, 1.51
          %v510 = vsub.f32 %v500, %v508
          %v511 = vsub.f32 %v507, %v509
          %v512 = vmul.f32 %v444, 1.51
          %v513 = vmul.f32 %v445, 1.51
          %v514 = vmul.f32 %v510, 0.99950004
          %v515 = vmul.f32 %v511, 0.99950004
          %v516 = vadd.f32 %v512, %v514
          %v517 = vadd.f32 %v513, %v515
          %v518 = vmul.f32 %v446, 1.51
          %v519 = vmul.f32 %v447, 1.51
          %v520 = vmul.f32 %v510, 0.009995334
          %v521 = vmul.f32 %v511, 0.009995334
          %v522 = vadd.f32 %v518, %v520
          %v523 = vadd.f32 %v519, %v521
          %v524 = vmul.f32 %v448, 1.51
          %v525 = vmul.f32 %v449, 1.51
          %v526 = vmul.f32 %v510, -0.0299955
          %v527 = vmul.f32 %v511, -0.0299955
          %v528 = vadd.f32 %v524, %v526
          %v529 = vadd.f32 %v525, %v527
          %v530 = vmul.f32 %v516, %v516
          %v531 = vmul.f32 %v517, %v517
          %v532 = vmul.f32 %v522, %v522
          %v533 = vmul.f32 %v523, %v523
          %v534 = vadd.f32 %v530, %v532
          %v535 = vadd.f32 %v531, %v533
          %v536 = vmul.f32 %v528, %v528
          %v537 = vmul.f32 %v529, %v529
          %v538 = vadd.f32 %v534, %v536
          %v539 = vadd.f32 %v535, %v537
          %v540 = vrsqrt.pop %v538
          %v541 = vrsqrt.pop %v539
          %v542 = vmul.f32 %v516, %v540
          %v543 = vmul.f32 %v517, %v541
          %v544 = vmul.f32 %v522, %v540
          %v545 = vmul.f32 %v523, %v541
          %v546 = vmul.f32 %v528, %v540
          %v547 = vmul.f32 %v529, %v541
          %v548 = vsub.f32 0.0, %v378
          %v549 = vsub.f32 0.0, %v379
          %v550 = vmax.f32 %v548, 0.0
          %v551 = vmax.f32 %v549, 0.0
          %v552 = vsub.f32 0.0, %v470
          %v553 = vsub.f32 0.0, %v471
          %v554 = vmax.f32 %v552, 0.0
          %v555 = vmax.f32 %v553, 0.0
          %v556 = vadd.f32 %v550, %v554
          %v557 = vadd.f32 %v551, %v555
          %v558 = vmul.f32 %v330, %v542
          %v559 = vmul.f32 %v331, %v543
          %v560 = vmul.f32 %v332, %v544
          %v561 = vmul.f32 %v333, %v545
          %v562 = vadd.f32 %v558, %v560
          %v563 = vadd.f32 %v559, %v561
          %v564 = vmul.f32 %v334, %v546
          %v565 = vmul.f32 %v335, %v547
          %v566 = vadd.f32 %v562, %v564
          %v567 = vadd.f32 %v563, %v565
          %v568 = vmul.f32 %v330, %v474
          %v569 = vmul.f32 %v331, %v475
          %v570 = vmul.f32 %v332, %v478
          %v571 = vmul.f32 %v333, %v479
          %v572 = vadd.f32 %v568, %v570
          %v573 = vadd.f32 %v569, %v571
          %v574 = vmul.f32 %v334, %v482
          %v575 = vmul.f32 %v335, %v483
          %v576 = vadd.f32 %v572, %v574
          %v577 = vadd.f32 %v573, %v575
          %v578 = vsub.f32 0.0, %v576
          %v579 = vsub.f32 0.0, %v577
          %v580 = vmul.f32 %v542, %v474
          %v581 = vmul.f32 %v543, %v475
          %v582 = vmul.f32 %v544, %v478
          %v583 = vmul.f32 %v545, %v479
          %v584 = vadd.f32 %v580, %v582
          %v585 = vadd.f32 %v581, %v583
          %v586 = vmul.f32 %v546, %v482
          %v587 = vmul.f32 %v547, %v483
          %v588 = vadd.f32 %v584, %v586
          %v589 = vadd.f32 %v585, %v587
          %v590 = vsub.f32 0.0, %v588
          %v591 = vsub.f32 0.0, %v589
          %v592 = vmul.f32 %v566, %v566
          %v593 = vmul.f32 %v567, %v567
          %v594 = vsub.f32 1.0, %v592
          %v595 = vsub.f32 1.0, %v593
          %v596 = vmax.f32 %v594, 1e-08
          %v597 = vmax.f32 %v595, 1e-08
          %v598 = vrcp.pop %v596
          %v599 = vrcp.pop %v597
          %v600 = vmul.f32 %v596, %v598
          %v601 = vmul.f32 %v597, %v599
          %v602 = vsub.f32 2.0, %v600
          %v603 = vsub.f32 2.0, %v601
          %v604 = vmul.f32 %v598, %v602
          %v605 = vmul.f32 %v599, %v603
          %v606 = vmul.f32 %v566, %v590
          %v607 = vmul.f32 %v567, %v591
          %v608 = vsub.f32 %v606, %v578
          %v609 = vsub.f32 %v607, %v579
          %v610 = vmul.f32 %v608, %v604
          %v611 = vmul.f32 %v609, %v605
          %v612 = vmul.f32 %v566, %v578
          %v613 = vmul.f32 %v567, %v579
          %v614 = vsub.f32 %v590, %v612
          %v615 = vsub.f32 %v591, %v613
          %v616 = vmul.f32 %v614, %v604
          %v617 = vmul.f32 %v615, %v605
          %v618 = vmul.f32 %v610, %v330
          %v619 = vmul.f32 %v611, %v331
          %v620 = vmul.f32 %v610, %v332
          %v621 = vmul.f32 %v611, %v333
          %v622 = vmul.f32 %v610, %v334
          %v623 = vmul.f32 %v611, %v335
          %v624 = vmul.f32 %v616, %v542
          %v625 = vmul.f32 %v617, %v543
          %v626 = vadd.f32 %v474, %v624
          %v627 = vadd.f32 %v475, %v625
          %v628 = vmul.f32 %v616, %v544
          %v629 = vmul.f32 %v617, %v545
          %v630 = vadd.f32 %v478, %v628
          %v631 = vadd.f32 %v479, %v629
          %v632 = vmul.f32 %v616, %v546
          %v633 = vmul.f32 %v617, %v547
          %v634 = vadd.f32 %v482, %v632
          %v635 = vadd.f32 %v483, %v633
          %v636 = vadd.f32 %v618, %v626
          %v637 = vadd.f32 %v619, %v627
          %v638 = vmul.f32 %v636, 0.5
          %v639 = vmul.f32 %v637, 0.5
          %v640 = vadd.f32 %v620, %v630
          %v641 = vadd.f32 %v621, %v631
          %v642 = vmul.f32 %v640, 0.5
          %v643 = vmul.f32 %v641, 0.5
          %v644 = vadd.f32 %v622, %v634
          %v645 = vadd.f32 %v623, %v635
          %v646 = vmul.f32 %v644, 0.5
          %v647 = vmul.f32 %v645, 0.5
          %v648 = vsub.f32 %v618, %v626
          %v649 = vsub.f32 %v619, %v627
          %v650 = vmul.f32 %v648, %v648
          %v651 = vmul.f32 %v649, %v649
          %v652 = vsub.f32 %v620, %v630
          %v653 = vsub.f32 %v621, %v631
          %v654 = vmul.f32 %v652, %v652
          %v655 = vmul.f32 %v653, %v653
          %v656 = vadd.f32 %v650, %v654
          %v657 = vadd.f32 %v651, %v655
          %v658 = vsub.f32 %v622, %v634
          %v659 = vsub.f32 %v623, %v635
          %v660 = vmul.f32 %v658, %v658
          %v661 = vmul.f32 %v659, %v659
          %v662 = vadd.f32 %v656, %v660
          %v663 = vadd.f32 %v657, %v661
          %v664 = vrsqrt.pop %v662
          %v665 = vmul.f32 %v662, %v664
          %vm666 = vcmp.eq.f32.partialorder %v662, inf
          %v667 = vsel %vm666, %v662, %v665
          %vm668 = vcmp.eq.f32.partialorder %v662, 0.0
          %v669 = vand.u32 %v662, 2147483648
          %v670 = vsel %vm668, %v669, %v667
          %v671 = vrsqrt.pop %v663
          %v672 = vmul.f32 %v663, %v671
          %vm673 = vcmp.eq.f32.partialorder %v663, inf
          %v674 = vsel %vm673, %v663, %v672
          %vm675 = vcmp.eq.f32.partialorder %v663, 0.0
          %v676 = vand.u32 %v663, 2147483648
          %v677 = vsel %vm675, %v676, %v674
          %v678 = vand.u32 2147483647, %v638
          %v679 = vand.u32 2147483647, %v639
          %vm680 = vcmp.lt.f32.partialorder %v678, 1e-08
          %vm681 = vcmp.lt.f32.partialorder %v679, 1e-08
          %v682 = vsel %vm680, 1e-08, %v638
          %v683 = vsel %vm681, 1e-08, %v639
          %v684 = vrcp.pop %v682
          %v685 = vrcp.pop %v683
          %v686 = vmul.f32 %v682, %v684
          %v687 = vmul.f32 %v683, %v685
          %v688 = vsub.f32 2.0, %v686
          %v689 = vsub.f32 2.0, %v687
          %v690 = vmul.f32 %v684, %v688
          %v691 = vmul.f32 %v685, %v689
          %v692 = vmul.f32 %v642, 20.0
          %v693 = vmul.f32 %v643, 20.0
          %v694 = vmul.f32 %v692, %v690
          %v695 = vmul.f32 %v693, %v691
          %v696 = vadd.f32 %v694, 8.0
          %v697 = vadd.f32 %v695, 8.0
          %v698 = vmul.f32 %v646, 20.0
          %v699 = vmul.f32 %v647, 20.0
          %v700 = vmul.f32 %v698, %v690
          %v701 = vmul.f32 %v699, %v691
          %v702 = vadd.f32 %v700, 8.0
          %v703 = vadd.f32 %v701, 8.0
          %v704 = vsub.f32 %v696, %v302
          %v705 = vsub.f32 %v697, %v303
          %v706 = vmul.f32 %v704, %v704
          %v707 = vmul.f32 %v705, %v705
          %v708 = vsub.f32 %v702, %v306
          %v709 = vsub.f32 %v703, %v307
          %v710 = vmul.f32 %v708, %v708
          %v711 = vmul.f32 %v709, %v709
          %v712 = vadd.f32 %v706, %v710
          %v713 = vadd.f32 %v707, %v711
          %v714 = vrsqrt.pop %v712
          %v715 = vmul.f32 %v712, %v714
          %vm716 = vcmp.eq.f32.partialorder %v712, inf
          %v717 = vsel %vm716, %v712, %v715
          %vm718 = vcmp.eq.f32.partialorder %v712, 0.0
          %v719 = vand.u32 %v712, 2147483648
          %v720 = vsel %vm718, %v719, %v717
          %v721 = vrsqrt.pop %v713
          %v722 = vmul.f32 %v713, %v721
          %vm723 = vcmp.eq.f32.partialorder %v713, inf
          %v724 = vsel %vm723, %v713, %v722
          %vm725 = vcmp.eq.f32.partialorder %v713, 0.0
          %v726 = vand.u32 %v713, 2147483648
          %v727 = vsel %vm725, %v726, %v724
          %v728 = vmul.f32 %v720, 0.5
          %v729 = vmul.f32 %v727, 0.5
          %s730 = scalar_lea.vmem %s282, %s300 [#allocation7]
          %731 = vst [vmem:[%s730] sm:$0xff] %v638
          %732 = vst [vmem:[%s730 + $0x8] sm:$0xff] %v639
          %s733 = sadd.s32 %s300, 64
          %s734 = scalar_lea.vmem %s282, %s733 [#allocation7]
          %735 = vst [vmem:[%s734] sm:$0xff] %v642
          %736 = vst [vmem:[%s734 + $0x8] sm:$0xff] %v643
          %s737 = sadd.s32 %s300, 128
          %s738 = scalar_lea.vmem %s282, %s737 [#allocation7]
          %739 = vst [vmem:[%s738] sm:$0xff] %v646
          %740 = vst [vmem:[%s738 + $0x8] sm:$0xff] %v647
          %s741 = sadd.s32 %s300, 192
          %s742 = scalar_lea.vmem %s282, %s741 [#allocation7]
          %743 = vst [vmem:[%s742] sm:$0xff] %v670
          %744 = vst [vmem:[%s742 + $0x8] sm:$0xff] %v677
          %s745 = sadd.s32 %s300, 256
          %s746 = scalar_lea.vmem %s282, %s745 [#allocation7]
          %747 = vst [vmem:[%s746] sm:$0xff] %v696
          %748 = vst [vmem:[%s746 + $0x8] sm:$0xff] %v697
          %s749 = sadd.s32 %s300, 320
          %s750 = scalar_lea.vmem %s282, %s749 [#allocation7]
          %751 = vst [vmem:[%s750] sm:$0xff] %v702
          %752 = vst [vmem:[%s750 + $0x8] sm:$0xff] %v703
          %s753 = sadd.s32 %s300, 384
          %s754 = scalar_lea.vmem %s282, %s753 [#allocation7]
          %755 = vst [vmem:[%s754] sm:$0xff] %v728
          %756 = vst [vmem:[%s754 + $0x8] sm:$0xff] %v729
          %s757 = sadd.s32 %s300, 448
          %s758 = scalar_lea.vmem %s282, %s757 [#allocation7]
          %759 = vst [vmem:[%s758] sm:$0xff] %v556
          %760 = vst [vmem:[%s758 + $0x8] sm:$0xff] %v557
          %s761 = scalar_lea.vmem %s248, %s733 [#allocation2]
          %v762 = vld [vmem:[%s761] sm:$0xff]
          %v763 = vld [vmem:[%s761 + $0x8] sm:$0xff]
          %s764 = sadd.s32 %s300, 96
          %s765 = scalar_lea.vmem %s248, %s764 [#allocation2]
          %v766 = vld [vmem:[%s765] sm:$0xff]
          %v767 = vld [vmem:[%s765 + $0x8] sm:$0xff]
          %s768 = scalar_lea.vmem %s257, %s733 [#allocation5]
          %v769 = vld [vmem:[%s768] sm:$0xff]
          %v770 = vld [vmem:[%s768 + $0x8] sm:$0xff]
          %s771 = scalar_lea.vmem %s257, %s764 [#allocation5]
          %v772 = vld [vmem:[%s771] sm:$0xff]
          %v773 = vld [vmem:[%s771 + $0x8] sm:$0xff]
          %v774 = vsub.f32 %v762, 8.0
          %v775 = vsub.f32 %v763, 8.0
          %v776 = vmul.f32 %v774, 0.05
          %v777 = vmul.f32 %v775, 0.05
          %v778 = vsub.f32 %v766, 8.0
          %v779 = vsub.f32 %v767, 8.0
          %v780 = vmul.f32 %v778, 0.05
          %v781 = vmul.f32 %v779, 0.05
          %v782 = vmul.f32 %v776, %v776
          %v783 = vmul.f32 %v777, %v777
          %v784 = vadd.f32 %v782, 1.0
          %v785 = vadd.f32 %v783, 1.0
          %v786 = vmul.f32 %v780, %v780
          %v787 = vmul.f32 %v781, %v781
          %v788 = vadd.f32 %v784, %v786
          %v789 = vadd.f32 %v785, %v787
          %v790 = vrsqrt.pop %v788
          %v791 = vrsqrt.pop %v789
          %v792 = vmul.f32 %v776, %v790
          %v793 = vmul.f32 %v777, %v791
          %v794 = vmul.f32 %v780, %v790
          %v795 = vmul.f32 %v781, %v791
          %v796 = vsub.f32 %v769, 8.0
          %v797 = vsub.f32 %v770, 8.0
          %v798 = vmul.f32 %v796, 0.05
          %v799 = vmul.f32 %v797, 0.05
          %v800 = vsub.f32 %v772, 8.0
          %v801 = vsub.f32 %v773, 8.0
          %v802 = vmul.f32 %v800, 0.05
          %v803 = vmul.f32 %v801, 0.05
          %v804 = vmul.f32 %v798, %v798
          %v805 = vmul.f32 %v799, %v799
          %v806 = vadd.f32 %v804, 1.0
          %v807 = vadd.f32 %v805, 1.0
          %v808 = vmul.f32 %v802, %v802
          %v809 = vmul.f32 %v803, %v803
          %v810 = vadd.f32 %v806, %v808
          %v811 = vadd.f32 %v807, %v809
          %v812 = vrsqrt.pop %v810
          %v813 = vrsqrt.pop %v811
          %v814 = vmul.f32 %v798, %v812
          %v815 = vmul.f32 %v799, %v813
          %v816 = vmul.f32 %v802, %v812
          %v817 = vmul.f32 %v803, %v813
          %v818 = vmul.f32 %v812, 0.99950004
          %v819 = vmul.f32 %v813, 0.99950004
          %v820 = vmul.f32 %v814, 0.009995334
          %v821 = vmul.f32 %v815, 0.009995334
          %v822 = vadd.f32 %v818, %v820
          %v823 = vadd.f32 %v819, %v821
          %v824 = vmul.f32 %v816, -0.0299955
          %v825 = vmul.f32 %v817, -0.0299955
          %v826 = vadd.f32 %v822, %v824
          %v827 = vadd.f32 %v823, %v825
          %v828 = vmax.f32 %v826, 1e-08
          %v829 = vmax.f32 %v827, 1e-08
          %v830 = vrcp.pop %v828
          %v831 = vrcp.pop %v829
          %v832 = vmul.f32 %v828, %v830
          %v833 = vmul.f32 %v829, %v831
          %v834 = vsub.f32 2.0, %v832
          %v835 = vsub.f32 2.0, %v833
          %v836 = vmul.f32 %v830, %v834
          %v837 = vmul.f32 %v831, %v835
          %v838 = vmul.f32 %v836, 39.975002
          %v839 = vmul.f32 %v837, 39.975002
          %v840 = vmul.f32 %v838, %v812
          %v841 = vmul.f32 %v839, %v813
          %v842 = vmul.f32 %v838, %v814
          %v843 = vmul.f32 %v839, %v815
          %v844 = vmul.f32 %v838, %v816
          %v845 = vmul.f32 %v839, %v817
          %v846 = vmul.f32 %v828, %v828
          %v847 = vmul.f32 %v829, %v829
          %v848 = vsub.f32 1.0, %v846
          %v849 = vsub.f32 1.0, %v847
          %v850 = vmul.f32 %v848, 0.43857726
          %v851 = vmul.f32 %v849, 0.43857726
          %v852 = vsub.f32 1.0, %v850
          %v853 = vsub.f32 1.0, %v851
          %v854 = vmax.f32 %v852, 0.0
          %v855 = vmax.f32 %v853, 0.0
          %v856 = vrsqrt.pop %v854
          %v857 = vmul.f32 %v854, %v856
          %vm858 = vcmp.eq.f32.partialorder %v854, inf
          %v859 = vsel %vm858, %v854, %v857
          %vm860 = vcmp.eq.f32.partialorder %v854, 0.0
          %v861 = vand.u32 %v854, 2147483648
          %v862 = vsel %vm860, %v861, %v859
          %v863 = vrsqrt.pop %v855
          %v864 = vmul.f32 %v855, %v863
          %vm865 = vcmp.eq.f32.partialorder %v855, inf
          %v866 = vsel %vm865, %v855, %v864
          %vm867 = vcmp.eq.f32.partialorder %v855, 0.0
          %v868 = vand.u32 %v855, 2147483648
          %v869 = vsel %vm867, %v868, %v866
          %v870 = vmul.f32 %v828, 0.66225165
          %v871 = vmul.f32 %v829, 0.66225165
          %v872 = vsub.f32 %v862, %v870
          %v873 = vsub.f32 %v869, %v871
          %v874 = vmul.f32 %v812, 0.66225165
          %v875 = vmul.f32 %v813, 0.66225165
          %v876 = vmul.f32 %v872, 0.99950004
          %v877 = vmul.f32 %v873, 0.99950004
          %v878 = vadd.f32 %v874, %v876
          %v879 = vadd.f32 %v875, %v877
          %v880 = vmul.f32 %v814, 0.66225165
          %v881 = vmul.f32 %v815, 0.66225165
          %v882 = vmul.f32 %v872, 0.009995334
          %v883 = vmul.f32 %v873, 0.009995334
          %v884 = vadd.f32 %v880, %v882
          %v885 = vadd.f32 %v881, %v883
          %v886 = vmul.f32 %v816, 0.66225165
          %v887 = vmul.f32 %v817, 0.66225165
          %v888 = vmul.f32 %v872, -0.0299955
          %v889 = vmul.f32 %v873, -0.0299955
          %v890 = vadd.f32 %v886, %v888
          %v891 = vadd.f32 %v887, %v889
          %v892 = vmul.f32 %v878, %v878
          %v893 = vmul.f32 %v879, %v879
          %v894 = vmul.f32 %v884, %v884
          %v895 = vmul.f32 %v885, %v885
          %v896 = vadd.f32 %v892, %v894
          %v897 = vadd.f32 %v893, %v895
          %v898 = vmul.f32 %v890, %v890
          %v899 = vmul.f32 %v891, %v891
          %v900 = vadd.f32 %v896, %v898
          %v901 = vadd.f32 %v897, %v899
          %v902 = vrsqrt.pop %v900
          %v903 = vrsqrt.pop %v901
          %v904 = vmul.f32 %v878, %v902
          %v905 = vmul.f32 %v879, %v903
          %v906 = vmul.f32 %v884, %v902
          %v907 = vmul.f32 %v885, %v903
          %v908 = vmul.f32 %v890, %v902
          %v909 = vmul.f32 %v891, %v903
          %v910 = vmul.f32 %v904, 0.99950004
          %v911 = vmul.f32 %v905, 0.99950004
          %v912 = vmul.f32 %v906, 0.009995334
          %v913 = vmul.f32 %v907, 0.009995334
          %v914 = vadd.f32 %v910, %v912
          %v915 = vadd.f32 %v911, %v913
          %v916 = vmul.f32 %v908, -0.0299955
          %v917 = vmul.f32 %v909, -0.0299955
          %v918 = vadd.f32 %v914, %v916
          %v919 = vadd.f32 %v915, %v917
          %v920 = vmax.f32 %v918, 1e-08
          %v921 = vmax.f32 %v919, 1e-08
          %v922 = vrcp.pop %v920
          %v923 = vrcp.pop %v921
          %v924 = vmul.f32 %v920, %v922
          %v925 = vmul.f32 %v921, %v923
          %v926 = vsub.f32 2.0, %v924
          %v927 = vsub.f32 2.0, %v925
          %v928 = vmul.f32 %v922, %v926
          %v929 = vmul.f32 %v923, %v927
          %v930 = vmul.f32 %v928, 20.0
          %v931 = vmul.f32 %v929, 20.0
          %v932 = vmul.f32 %v930, %v904
          %v933 = vmul.f32 %v931, %v905
          %v934 = vadd.f32 %v840, %v932
          %v935 = vadd.f32 %v841, %v933
          %v936 = vmul.f32 %v930, %v906
          %v937 = vmul.f32 %v931, %v907
          %v938 = vadd.f32 %v842, %v936
          %v939 = vadd.f32 %v843, %v937
          %v940 = vmul.f32 %v930, %v908
          %v941 = vmul.f32 %v931, %v909
          %v942 = vadd.f32 %v844, %v940
          %v943 = vadd.f32 %v845, %v941
          %v944 = vmul.f32 %v920, %v920
          %v945 = vmul.f32 %v921, %v921
          %v946 = vsub.f32 1.0, %v944
          %v947 = vsub.f32 1.0, %v945
          %v948 = vmul.f32 %v946, 2.2801
          %v949 = vmul.f32 %v947, 2.2801
          %v950 = vsub.f32 1.0, %v948
          %v951 = vsub.f32 1.0, %v949
          %v952 = vmax.f32 %v950, 0.0
          %v953 = vmax.f32 %v951, 0.0
          %v954 = vrsqrt.pop %v952
          %v955 = vmul.f32 %v952, %v954
          %vm956 = vcmp.eq.f32.partialorder %v952, inf
          %v957 = vsel %vm956, %v952, %v955
          %vm958 = vcmp.eq.f32.partialorder %v952, 0.0
          %v959 = vand.u32 %v952, 2147483648
          %v960 = vsel %vm958, %v959, %v957
          %v961 = vrsqrt.pop %v953
          %v962 = vmul.f32 %v953, %v961
          %vm963 = vcmp.eq.f32.partialorder %v953, inf
          %v964 = vsel %vm963, %v953, %v962
          %vm965 = vcmp.eq.f32.partialorder %v953, 0.0
          %v966 = vand.u32 %v953, 2147483648
          %v967 = vsel %vm965, %v966, %v964
          %v968 = vmul.f32 %v920, 1.51
          %v969 = vmul.f32 %v921, 1.51
          %v970 = vsub.f32 %v960, %v968
          %v971 = vsub.f32 %v967, %v969
          %v972 = vmul.f32 %v904, 1.51
          %v973 = vmul.f32 %v905, 1.51
          %v974 = vmul.f32 %v970, 0.99950004
          %v975 = vmul.f32 %v971, 0.99950004
          %v976 = vadd.f32 %v972, %v974
          %v977 = vadd.f32 %v973, %v975
          %v978 = vmul.f32 %v906, 1.51
          %v979 = vmul.f32 %v907, 1.51
          %v980 = vmul.f32 %v970, 0.009995334
          %v981 = vmul.f32 %v971, 0.009995334
          %v982 = vadd.f32 %v978, %v980
          %v983 = vadd.f32 %v979, %v981
          %v984 = vmul.f32 %v908, 1.51
          %v985 = vmul.f32 %v909, 1.51
          %v986 = vmul.f32 %v970, -0.0299955
          %v987 = vmul.f32 %v971, -0.0299955
          %v988 = vadd.f32 %v984, %v986
          %v989 = vadd.f32 %v985, %v987
          %v990 = vmul.f32 %v976, %v976
          %v991 = vmul.f32 %v977, %v977
          %v992 = vmul.f32 %v982, %v982
          %v993 = vmul.f32 %v983, %v983
          %v994 = vadd.f32 %v990, %v992
          %v995 = vadd.f32 %v991, %v993
          %v996 = vmul.f32 %v988, %v988
          %v997 = vmul.f32 %v989, %v989
          %v998 = vadd.f32 %v994, %v996
          %v999 = vadd.f32 %v995, %v997
          %v1000 = vrsqrt.pop %v998
          %v1001 = vrsqrt.pop %v999
          %v1002 = vmul.f32 %v976, %v1000
          %v1003 = vmul.f32 %v977, %v1001
          %v1004 = vmul.f32 %v982, %v1000
          %v1005 = vmul.f32 %v983, %v1001
          %v1006 = vmul.f32 %v988, %v1000
          %v1007 = vmul.f32 %v989, %v1001
          %v1008 = vsub.f32 0.0, %v838
          %v1009 = vsub.f32 0.0, %v839
          %v1010 = vmax.f32 %v1008, 0.0
          %v1011 = vmax.f32 %v1009, 0.0
          %v1012 = vsub.f32 0.0, %v930
          %v1013 = vsub.f32 0.0, %v931
          %v1014 = vmax.f32 %v1012, 0.0
          %v1015 = vmax.f32 %v1013, 0.0
          %v1016 = vadd.f32 %v1010, %v1014
          %v1017 = vadd.f32 %v1011, %v1015
          %v1018 = vmul.f32 %v790, %v1002
          %v1019 = vmul.f32 %v791, %v1003
          %v1020 = vmul.f32 %v792, %v1004
          %v1021 = vmul.f32 %v793, %v1005
          %v1022 = vadd.f32 %v1018, %v1020
          %v1023 = vadd.f32 %v1019, %v1021
          %v1024 = vmul.f32 %v794, %v1006
          %v1025 = vmul.f32 %v795, %v1007
          %v1026 = vadd.f32 %v1022, %v1024
          %v1027 = vadd.f32 %v1023, %v1025
          %v1028 = vmul.f32 %v790, %v934
          %v1029 = vmul.f32 %v791, %v935
          %v1030 = vmul.f32 %v792, %v938
          %v1031 = vmul.f32 %v793, %v939
          %v1032 = vadd.f32 %v1028, %v1030
          %v1033 = vadd.f32 %v1029, %v1031
          %v1034 = vmul.f32 %v794, %v942
          %v1035 = vmul.f32 %v795, %v943
          %v1036 = vadd.f32 %v1032, %v1034
          %v1037 = vadd.f32 %v1033, %v1035
          %v1038 = vsub.f32 0.0, %v1036
          %v1039 = vsub.f32 0.0, %v1037
          %v1040 = vmul.f32 %v1002, %v934
          %v1041 = vmul.f32 %v1003, %v935
          %v1042 = vmul.f32 %v1004, %v938
          %v1043 = vmul.f32 %v1005, %v939
          %v1044 = vadd.f32 %v1040, %v1042
          %v1045 = vadd.f32 %v1041, %v1043
          %v1046 = vmul.f32 %v1006, %v942
          %v1047 = vmul.f32 %v1007, %v943
          %v1048 = vadd.f32 %v1044, %v1046
          %v1049 = vadd.f32 %v1045, %v1047
          %v1050 = vsub.f32 0.0, %v1048
          %v1051 = vsub.f32 0.0, %v1049
          %v1052 = vmul.f32 %v1026, %v1026
          %v1053 = vmul.f32 %v1027, %v1027
          %v1054 = vsub.f32 1.0, %v1052
          %v1055 = vsub.f32 1.0, %v1053
          %v1056 = vmax.f32 %v1054, 1e-08
          %v1057 = vmax.f32 %v1055, 1e-08
          %v1058 = vrcp.pop %v1056
          %v1059 = vrcp.pop %v1057
          %v1060 = vmul.f32 %v1056, %v1058
          %v1061 = vmul.f32 %v1057, %v1059
          %v1062 = vsub.f32 2.0, %v1060
          %v1063 = vsub.f32 2.0, %v1061
          %v1064 = vmul.f32 %v1058, %v1062
          %v1065 = vmul.f32 %v1059, %v1063
          %v1066 = vmul.f32 %v1026, %v1050
          %v1067 = vmul.f32 %v1027, %v1051
          %v1068 = vsub.f32 %v1066, %v1038
          %v1069 = vsub.f32 %v1067, %v1039
          %v1070 = vmul.f32 %v1068, %v1064
          %v1071 = vmul.f32 %v1069, %v1065
          %v1072 = vmul.f32 %v1026, %v1038
          %v1073 = vmul.f32 %v1027, %v1039
          %v1074 = vsub.f32 %v1050, %v1072
          %v1075 = vsub.f32 %v1051, %v1073
          %v1076 = vmul.f32 %v1074, %v1064
          %v1077 = vmul.f32 %v1075, %v1065
          %v1078 = vmul.f32 %v1070, %v790
          %v1079 = vmul.f32 %v1071, %v791
          %v1080 = vmul.f32 %v1070, %v792
          %v1081 = vmul.f32 %v1071, %v793
          %v1082 = vmul.f32 %v1070, %v794
          %v1083 = vmul.f32 %v1071, %v795
          %v1084 = vmul.f32 %v1076, %v1002
          %v1085 = vmul.f32 %v1077, %v1003
          %v1086 = vadd.f32 %v934, %v1084
          %v1087 = vadd.f32 %v935, %v1085
          %v1088 = vmul.f32 %v1076, %v1004
          %v1089 = vmul.f32 %v1077, %v1005
          %v1090 = vadd.f32 %v938, %v1088
          %v1091 = vadd.f32 %v939, %v1089
          %v1092 = vmul.f32 %v1076, %v1006
          %v1093 = vmul.f32 %v1077, %v1007
          %v1094 = vadd.f32 %v942, %v1092
          %v1095 = vadd.f32 %v943, %v1093
          %v1096 = vadd.f32 %v1078, %v1086
          %v1097 = vadd.f32 %v1079, %v1087
          %v1098 = vmul.f32 %v1096, 0.5
          %v1099 = vmul.f32 %v1097, 0.5
          %v1100 = vadd.f32 %v1080, %v1090
          %v1101 = vadd.f32 %v1081, %v1091
          %v1102 = vmul.f32 %v1100, 0.5
          %v1103 = vmul.f32 %v1101, 0.5
          %v1104 = vadd.f32 %v1082, %v1094
          %v1105 = vadd.f32 %v1083, %v1095
          %v1106 = vmul.f32 %v1104, 0.5
          %v1107 = vmul.f32 %v1105, 0.5
          %v1108 = vsub.f32 %v1078, %v1086
          %v1109 = vsub.f32 %v1079, %v1087
          %v1110 = vmul.f32 %v1108, %v1108
          %v1111 = vmul.f32 %v1109, %v1109
          %v1112 = vsub.f32 %v1080, %v1090
          %v1113 = vsub.f32 %v1081, %v1091
          %v1114 = vmul.f32 %v1112, %v1112
          %v1115 = vmul.f32 %v1113, %v1113
          %v1116 = vadd.f32 %v1110, %v1114
          %v1117 = vadd.f32 %v1111, %v1115
          %v1118 = vsub.f32 %v1082, %v1094
          %v1119 = vsub.f32 %v1083, %v1095
          %v1120 = vmul.f32 %v1118, %v1118
          %v1121 = vmul.f32 %v1119, %v1119
          %v1122 = vadd.f32 %v1116, %v1120
          %v1123 = vadd.f32 %v1117, %v1121
          %v1124 = vrsqrt.pop %v1122
          %v1125 = vmul.f32 %v1122, %v1124
          %vm1126 = vcmp.eq.f32.partialorder %v1122, inf
          %v1127 = vsel %vm1126, %v1122, %v1125
          %vm1128 = vcmp.eq.f32.partialorder %v1122, 0.0
          %v1129 = vand.u32 %v1122, 2147483648
          %v1130 = vsel %vm1128, %v1129, %v1127
          %v1131 = vrsqrt.pop %v1123
          %v1132 = vmul.f32 %v1123, %v1131
          %vm1133 = vcmp.eq.f32.partialorder %v1123, inf
          %v1134 = vsel %vm1133, %v1123, %v1132
          %vm1135 = vcmp.eq.f32.partialorder %v1123, 0.0
          %v1136 = vand.u32 %v1123, 2147483648
          %v1137 = vsel %vm1135, %v1136, %v1134
          %v1138 = vand.u32 2147483647, %v1098
          %v1139 = vand.u32 2147483647, %v1099
          %vm1140 = vcmp.lt.f32.partialorder %v1138, 1e-08
          %vm1141 = vcmp.lt.f32.partialorder %v1139, 1e-08
          %v1142 = vsel %vm1140, 1e-08, %v1098
          %v1143 = vsel %vm1141, 1e-08, %v1099
          %v1144 = vrcp.pop %v1142
          %v1145 = vrcp.pop %v1143
          %v1146 = vmul.f32 %v1142, %v1144
          %v1147 = vmul.f32 %v1143, %v1145
          %v1148 = vsub.f32 2.0, %v1146
          %v1149 = vsub.f32 2.0, %v1147
          %v1150 = vmul.f32 %v1144, %v1148
          %v1151 = vmul.f32 %v1145, %v1149
          %v1152 = vmul.f32 %v1102, 20.0
          %v1153 = vmul.f32 %v1103, 20.0
          %v1154 = vmul.f32 %v1152, %v1150
          %v1155 = vmul.f32 %v1153, %v1151
          %v1156 = vadd.f32 %v1154, 8.0
          %v1157 = vadd.f32 %v1155, 8.0
          %v1158 = vmul.f32 %v1106, 20.0
          %v1159 = vmul.f32 %v1107, 20.0
          %v1160 = vmul.f32 %v1158, %v1150
          %v1161 = vmul.f32 %v1159, %v1151
          %v1162 = vadd.f32 %v1160, 8.0
          %v1163 = vadd.f32 %v1161, 8.0
          %v1164 = vsub.f32 %v1156, %v762
          %v1165 = vsub.f32 %v1157, %v763
          %v1166 = vmul.f32 %v1164, %v1164
          %v1167 = vmul.f32 %v1165, %v1165
          %v1168 = vsub.f32 %v1162, %v766
          %v1169 = vsub.f32 %v1163, %v767
          %v1170 = vmul.f32 %v1168, %v1168
          %v1171 = vmul.f32 %v1169, %v1169
          %v1172 = vadd.f32 %v1166, %v1170
          %v1173 = vadd.f32 %v1167, %v1171
          %v1174 = vrsqrt.pop %v1172
          %v1175 = vmul.f32 %v1172, %v1174
          %vm1176 = vcmp.eq.f32.partialorder %v1172, inf
          %v1177 = vsel %vm1176, %v1172, %v1175
          %vm1178 = vcmp.eq.f32.partialorder %v1172, 0.0
          %v1179 = vand.u32 %v1172, 2147483648
          %v1180 = vsel %vm1178, %v1179, %v1177
          %v1181 = vrsqrt.pop %v1173
          %v1182 = vmul.f32 %v1173, %v1181
          %vm1183 = vcmp.eq.f32.partialorder %v1173, inf
          %v1184 = vsel %vm1183, %v1173, %v1182
          %vm1185 = vcmp.eq.f32.partialorder %v1173, 0.0
          %v1186 = vand.u32 %v1173, 2147483648
          %v1187 = vsel %vm1185, %v1186, %v1184
          %v1188 = vmul.f32 %v1180, 0.5
          %v1189 = vmul.f32 %v1187, 0.5
          %s1190 = scalar_lea.vmem %s282, %s304 [#allocation7]
          %1191 = vst [vmem:[%s1190] sm:$0xff] %v1098
          %1192 = vst [vmem:[%s1190 + $0x8] sm:$0xff] %v1099
          %s1193 = scalar_lea.vmem %s282, %s764 [#allocation7]
          %1194 = vst [vmem:[%s1193] sm:$0xff] %v1102
          %1195 = vst [vmem:[%s1193 + $0x8] sm:$0xff] %v1103
          %s1196 = sadd.s32 %s300, 160
          %s1197 = scalar_lea.vmem %s282, %s1196 [#allocation7]
          %1198 = vst [vmem:[%s1197] sm:$0xff] %v1106
          %1199 = vst [vmem:[%s1197 + $0x8] sm:$0xff] %v1107
          %s1200 = sadd.s32 %s300, 224
          %s1201 = scalar_lea.vmem %s282, %s1200 [#allocation7]
          %1202 = vst [vmem:[%s1201] sm:$0xff] %v1130
          %1203 = vst [vmem:[%s1201 + $0x8] sm:$0xff] %v1137
          %s1204 = sadd.s32 %s300, 288
          %s1205 = scalar_lea.vmem %s282, %s1204 [#allocation7]
          %1206 = vst [vmem:[%s1205] sm:$0xff] %v1156
          %1207 = vst [vmem:[%s1205 + $0x8] sm:$0xff] %v1157
          %s1208 = sadd.s32 %s300, 352
          %s1209 = scalar_lea.vmem %s282, %s1208 [#allocation7]
          %1210 = vst [vmem:[%s1209] sm:$0xff] %v1162
          %1211 = vst [vmem:[%s1209 + $0x8] sm:$0xff] %v1163
          %s1212 = sadd.s32 %s300, 416
          %s1213 = scalar_lea.vmem %s282, %s1212 [#allocation7]
          %1214 = vst [vmem:[%s1213] sm:$0xff] %v1188
          %1215 = vst [vmem:[%s1213 + $0x8] sm:$0xff] %v1189
          %s1216 = sadd.s32 %s300, 480
          %s1217 = scalar_lea.vmem %s282, %s1216 [#allocation7]
          %1218 = vst [vmem:[%s1217] sm:$0xff] %v1016
          %1219 = vst [vmem:[%s1217 + $0x8] sm:$0xff] %v1017
          %v1220 = vsub.f32 %v638, %v1098
          %v1221 = vsub.f32 %v639, %v1099
          %v1222 = vmul.f32 %v1220, %v1220
          %v1223 = vmul.f32 %v1221, %v1221
          %v1224 = vsub.f32 %v642, %v1102
          %v1225 = vsub.f32 %v643, %v1103
          %v1226 = vmul.f32 %v1224, %v1224
          %v1227 = vmul.f32 %v1225, %v1225
          %v1228 = vadd.f32 %v1222, %v1226
          %v1229 = vadd.f32 %v1223, %v1227
          %v1230 = vsub.f32 %v646, %v1106
          %v1231 = vsub.f32 %v647, %v1107
          %v1232 = vmul.f32 %v1230, %v1230
          %v1233 = vmul.f32 %v1231, %v1231
          %v1234 = vadd.f32 %v1228, %v1232
          %v1235 = vadd.f32 %v1229, %v1233
          %v1236 = vrsqrt.pop %v1234
          %v1237 = vmul.f32 %v1234, %v1236
          %vm1238 = vcmp.eq.f32.partialorder %v1234, inf
          %v1239 = vsel %vm1238, %v1234, %v1237
          %vm1240 = vcmp.eq.f32.partialorder %v1234, 0.0
          %v1241 = vand.u32 %v1234, 2147483648
          %v1242 = vsel %vm1240, %v1241, %v1239
          %v1243 = vrsqrt.pop %v1235
          %v1244 = vmul.f32 %v1235, %v1243
          %vm1245 = vcmp.eq.f32.partialorder %v1235, inf
          %v1246 = vsel %vm1245, %v1235, %v1244
          %vm1247 = vcmp.eq.f32.partialorder %v1235, 0.0
          %v1248 = vand.u32 %v1235, 2147483648
          %v1249 = vsel %vm1247, %v1248, %v1246
          %s1250 = scalar_lea.vmem %s289, %s300 [#allocation8]
          %1251 = vst [vmem:[%s1250] sm:$0xff] %v1242
          %1252 = vst [vmem:[%s1250 + $0x8] sm:$0xff] %v1249
        $region41: #{tpu_custom_call.1} parent=27 // loop_footer
          %s299 = sadd.s32 1, %s295
        $region42: #{tpu_custom_call.1} parent=27 // loop_footer_branch
          %294 = sbr.rel target = $region38
        $region43: #{tpu_custom_call.1} parent=27 // loop_exit
          _
        %s1253 = sand.u32 %s87, 1
        %s1254 = scalar_lea.sflag [#allocation4], %s1253
        %s1255 = sand.u32 %s87, 1
        %s1256 = smul.addr %s1255, 512
        %s1257 = scalar_lea.vmem [#allocation7], %s1256
        %s1258 = sand.u32 %s113, 1
        %s1259 = scalar_lea.sflag [#allocation9], %s1258
        %s1260 = sand.u32 %s113, 1
        %s1261 = smul.addr %s1260, 32
        %s1262 = scalar_lea.vmem [#allocation8], %s1261
        // Predicated region
        $region44: #{tpu_custom_call.1} parent=27 // pred_check
          %p1263 = pneg %p97
        $region45: #{tpu_custom_call.1} parent=27 // pred_check_branch
          %1265 = sbr.rel (%p1263) target = $region47
        $region46: #{tpu_custom_call.1} parent=27 // pred_region
          #allocation15 [shape = 'u32[6]{0}', space=smem, size = 0x18, scoped, tag = 'DMA stride descriptor']
          %s1266 = smul.u32 4, %s27
          %s1268 = ssub.s32 8192, 8192
          %1269 = vsyncadd %s1254, %s1268
          %s1270 = smul.addr %s1266, 128
          %s1271 = scalar_lea.hbm %s2, %s1270
          %s1273 = sshll.u32 1, 14
          %s1274 = sxor.u32 4294967295, %s1273
          %s1277 = sshll.u32 7, 18
          %s1278 = sxor.u32 4294967295, %s1277
          %s1279 = sand.u32 0, %s1278
          %s1281 = sor.u32 %s1279, 0
          %s1283 = sshll.u32 3, 24
          %s1284 = sxor.u32 4294967295, %s1283
          %s1285 = sand.u32 %s1281, %s1284
          %s1287 = sor.u32 %s1285, 0
          %s1288 = sshll.u32 %s1257, 4
          %s1289 = int_to_ptr.vmem [resolvable:$true] %s1288
          %1295 = sst [smem:[#allocation15]] 512
          %s1296 = scalar_lea.smem [#allocation15], 1
          %1297 = sst [smem:[%s1296]] 1024
          %s1298 = scalar_lea.smem [#allocation15], 2
          %1299 = sst [smem:[%s1298]] 4
          %s1300 = scalar_lea.smem [#allocation15], 3
          %1301 = sst [smem:[%s1300]] 128
          %s1302 = scalar_lea.smem [#allocation15], 4
          %1303 = sst [smem:[%s1302]] 128
          %s1304 = scalar_lea.smem [#allocation15], 5
          %1305 = sst [smem:[%s1304]] 8
          %1307 = dma.general %s1289, 8192, %s1271, %s1254, [#allocation14], [#allocation15], %s1287, 0
        $region47: #{tpu_custom_call.1} parent=27 // pred_fallthru
          _
        // Predicated region
        $region48: #{tpu_custom_call.1} parent=27 // pred_check
          %p1308 = pneg %p123
        $region49: #{tpu_custom_call.1} parent=27 // pred_check_branch
          %1310 = sbr.rel (%p1308) target = $region51
        $region50: #{tpu_custom_call.1} parent=27 // pred_region
          %s1311 = smul.u32 4, %s27
          %s1313 = ssub.s32 512, 512
          %1314 = vsyncadd %s1259, %s1313
          %s1315 = smul.addr %s1311, 128
          %s1316 = scalar_lea.hbm %s3, %s1315
          %s1317 = sshll.u32 %s1262, 4
          %s1318 = int_to_ptr.vmem [resolvable:$true] %s1317
          %1323 = dma.vmem_to_hbm [thread:$0]  %s1318, 512, %s1316, %s1259, 128, 128, 8
        $region51: #{tpu_custom_call.1} parent=27 // pred_fallthru
          _
      $region28: #{tpu_custom_call.1} parent=5 // pred_fallthru
        _
      %p1324 = scmp.le.s32.totalorder 2, %s22
      // Predicated region
      $region52: #{tpu_custom_call.1} parent=5 // pred_check
        %p1325 = pneg %p1324
      $region53: #{tpu_custom_call.1} parent=5 // pred_check_branch
        %1327 = sbr.rel (%p1325) target = $region55
      $region54: #{tpu_custom_call.1} parent=5 // pred_region
        %s1328 = ssub.s32 %s22, 2
        // Predicated region
        $region56: #{tpu_custom_call.1} parent=54 // pred_check
          %p1329 = pneg %p103
        $region57: #{tpu_custom_call.1} parent=54 // pred_check_branch
          %1331 = sbr.rel (%p1329) target = $region59
        $region58: #{tpu_custom_call.1} parent=54 // pred_region
          %s1332 = sand.u32 %s88, 1
          %s1333 = scalar_lea.sflag [#allocation4], %s1332
          %s1334 = sand.u32 %s88, 1
          %s1335 = smul.addr %s1334, 512
          %s1336 = scalar_lea.vmem [#allocation7], %s1335
          %1337 = dma.done %s1333, 8192
        $region59: #{tpu_custom_call.1} parent=54 // pred_fallthru
          _
        // Predicated region
        $region60: #{tpu_custom_call.1} parent=54 // pred_check
          %p1338 = pneg %p129
        $region61: #{tpu_custom_call.1} parent=54 // pred_check_branch
          %1340 = sbr.rel (%p1338) target = $region63
        $region62: #{tpu_custom_call.1} parent=54 // pred_region
          %s1341 = sand.u32 %s114, 1
          %s1342 = scalar_lea.sflag [#allocation9], %s1341
          %s1343 = sand.u32 %s114, 1
          %s1344 = smul.addr %s1343, 32
          %s1345 = scalar_lea.vmem [#allocation8], %s1344
          %1346 = dma.done %s1342, 512
        $region63: #{tpu_custom_call.1} parent=54 // pred_fallthru
          _
      $region55: #{tpu_custom_call.1} parent=5 // pred_fallthru
        _
    $region6: #{tpu_custom_call.1} parent=1 // loop_footer
      %s26 = sadd.s32 1, %s22
    $region7: #{tpu_custom_call.1} parent=1 // loop_footer_branch
      %21 = sbr.rel target = $region3
    $region8: #{tpu_custom_call.1} parent=1 // loop_exit
      _
    %1347 = vsyncpa [#allocation3], 1
    %s1348 = scalar_lea.sflag [#allocation3], 1
    %1349 = vsyncpa %s1348, 1
    %1350 = vsyncpa [#allocation6], 1
    %s1351 = scalar_lea.sflag [#allocation6], 1
    %1352 = vsyncpa %s1351, 1
    %1353 = vsyncpa [#allocation4], 1
    %s1354 = scalar_lea.sflag [#allocation4], 1
    %1355 = vsyncpa %s1354, 1
    %1356 = vsyncpa [#allocation9], 1
    %s1357 = scalar_lea.sflag [#allocation9], 1
    %1358 = vsyncpa %s1357, 1

</llo_original>
